<compile_context>
chip_gen: v7x
topology: tpu7x:2x2x1
jax: 0.10.0
libtpu: 0.0.40
codegen_flags: <defaults>
</compile_context>

<pallas_src>
import functools

import jax
import jax.numpy as jnp
from jax.experimental import pallas as pl
from jax.experimental.pallas import tpu as pltpu


def _double_conv_kernel(x_ref, w1_ref, b1_ref, w2_ref, b2_ref, o_ref):
    # x_ref : (1, H, W, Cin)   bf16 activations, one batch element
    # w1_ref: (9*Cin, Cout)    bf16 weights, K order = (dy, dx, cin)
    # b1_ref: (1, Cout)        f32
    # w2_ref: (9*Cout, Cout)   bf16
    # b2_ref: (1, Cout)        f32
    # o_ref : (1, H, W, Cout)  f32
    _, H, W, Cin = x_ref.shape
    Cout = o_ref.shape[-1]

    def conv3x3_relu(x, w_flat, b):
        # x: (H, W, C) -> (H*W, Cout) f32; same-padded 3x3 conv + bias + ReLU.
        C = x.shape[-1]
        # Horizontal zero-pad, then 3 dx taps stacked on the channel axis.
        zc = jnp.zeros((H, 1, C), x.dtype)
        xw = jnp.concatenate([zc, x, zc], axis=1)                 # (H, W+2, C)
        band = jnp.concatenate(
            [xw[:, 0:W], xw[:, 1:W + 1], xw[:, 2:W + 2]], axis=-1)  # (H, W, 3C)
        # Vertical zero-pad, then 3 dy taps stacked on the channel axis.
        zr = jnp.zeros((1, W, 3 * C), band.dtype)
        bandp = jnp.concatenate([zr, band, zr], axis=0)           # (H+2, W, 3C)
        patches = jnp.concatenate(
            [bandp[0:H], bandp[1:H + 1], bandp[2:H + 2]], axis=-1)  # (H, W, 9C)
        patches = patches.reshape(H * W, 9 * C)
        # Single MXU matmul, f32 accumulation.
        acc = jnp.dot(patches, w_flat, preferred_element_type=jnp.float32)
        acc = acc + b                                             # (H*W, Cout) f32
        return jnp.maximum(acc, 0.0)

    b1 = b1_ref[...].astype(jnp.float32)
    b2 = b2_ref[...].astype(jnp.float32)

    h = conv3x3_relu(x_ref[0], w1_ref[...], b1)                   # (H*W, Cout) f32
    h = h.astype(w2_ref.dtype).reshape(H, W, Cout)                # bf16 for MXU
    y = conv3x3_relu(h, w2_ref[...], b2)                          # (H*W, Cout) f32
    o_ref[...] = y.reshape(1, H, W, Cout).astype(o_ref.dtype)


def double_conv_nhwc(x_nhwc, params, *, compute_dtype=jnp.bfloat16):
    """Fused DoubleConv on NHWC input via a single Pallas TPU kernel."""
    N, H, W, Cin = x_nhwc.shape
    Cout = params["w1"].shape[-1]

    x = x_nhwc.astype(compute_dtype)
    # Flatten HWIO -> (9*Cin, Cout) so the kernel does one matmul per conv.
    w1 = params["w1"].reshape(9 * Cin, Cout).astype(compute_dtype)
    w2 = params["w2"].reshape(9 * Cout, Cout).astype(compute_dtype)
    b1 = params["b1"].reshape(1, Cout).astype(jnp.float32)
    b2 = params["b2"].reshape(1, Cout).astype(jnp.float32)

    return pl.pallas_call(
        _double_conv_kernel,
        out_shape=jax.ShapeDtypeStruct((N, H, W, Cout), jnp.float32),
        grid=(N,),
        in_specs=[
            pl.BlockSpec((1, H, W, Cin), lambda n: (n, 0, 0, 0)),
            pl.BlockSpec((9 * Cin, Cout), lambda n: (0, 0)),
            pl.BlockSpec((1, Cout), lambda n: (0, 0)),
            pl.BlockSpec((9 * Cout, Cout), lambda n: (0, 0)),
            pl.BlockSpec((1, Cout), lambda n: (0, 0)),
        ],
        out_specs=pl.BlockSpec((1, H, W, Cout), lambda n: (n, 0, 0, 0)),
        compiler_params=pltpu.CompilerParams(
            dimension_semantics=("parallel",)),
    )(x, w1, b1, w2, b2)


def init_double_conv_params(key, in_channels, out_channels, dtype=jnp.float32):
    """Deterministic init matching nn.Conv2d(k=3, padding=1) parameter shapes."""
    k1, k2, k3, k4 = jax.random.split(key, 4)

    def conv_init(kw, kb, cin, cout):
        fan_in = cin * 3 * 3
        bound = 1.0 / jnp.sqrt(jnp.float32(fan_in))
        # PyTorch OIHW -> HWIO (dy, dx, cin, cout) for the NHWC kernel.
        w_oihw = jax.random.uniform(kw, (cout, cin, 3, 3), dtype, -bound, bound)
        w_hwio = jnp.transpose(w_oihw, (2, 3, 1, 0))
        b = jax.random.uniform(kb, (cout,), dtype, -bound, bound)
        return w_hwio, b

    w1, b1 = conv_init(k1, k2, in_channels, out_channels)
    w2, b2 = conv_init(k3, k4, out_channels, out_channels)
    return {"w1": w1, "b1": b1, "w2": w2, "b2": b2}


@jax.jit
def double_conv_forward(x_nchw, params):
    """Forward pass of DoubleConv. Input/output are NCHW to match PyTorch."""
    x_nhwc = jnp.transpose(x_nchw, (0, 2, 3, 1))
    y = double_conv_nhwc(x_nhwc, params)
    return jnp.transpose(y, (0, 3, 1, 2))


def _reference_double_conv(x_nchw, params):
    """Pure-JAX f32 reference (lax.conv) for correctness checking."""
    def conv(x, w_hwio, b):
        w_oihw = jnp.transpose(w_hwio, (3, 2, 0, 1))
        y = jax.lax.conv_general_dilated(
            x, w_oihw, window_strides=(1, 1), padding=((1, 1), (1, 1)),
            dimension_numbers=("NCHW", "OIHW", "NCHW"))
        return jnp.maximum(y + b[None, :, None, None], 0.0)

    h = conv(x_nchw, params["w1"], params["b1"])
    return conv(h, params["w2"], params["b2"])


if __name__ == "__main__":
    key = jax.random.PRNGKey(0)
    k_x, k_p = jax.random.split(key)

    N, Cin, Cout, H, W = 2, 4, 8, 16, 16
    x = jax.random.normal(k_x, (N, Cin, H, W), jnp.float32)
    params = init_double_conv_params(k_p, Cin, Cout)

    out = double_conv_forward(x, params)
    out = jax.block_until_ready(out)

    ref = _reference_double_conv(x, params)
    assert out.shape == (N, Cout, H, W)
    # bf16 matmul inputs with f32 accumulation -> looser tolerance than the f32 path.
    assert jnp.allclose(out, ref, atol=3e-2, rtol=3e-2), "mismatch vs reference"

    print("KERNEL_OK")
</pallas_src>

<mosaic_0001>
module attributes {stable_mosaic.version = 11 : i64} {
  func.func @_double_conv_kernel(%arg0: i32, %arg1: memref<1x16x16x4xbf16, #tpu.memory_space<vmem>>, %arg2: memref<36x8xbf16, #tpu.memory_space<vmem>>, %arg3: memref<1x8xf32, #tpu.memory_space<vmem>>, %arg4: memref<72x8xbf16, #tpu.memory_space<vmem>>, %arg5: memref<1x8xf32, #tpu.memory_space<vmem>>, %arg6: memref<1x16x16x8xf32, #tpu.memory_space<vmem>>) attributes {dimension_semantics = [#tpu.dimension_semantics<parallel>], iteration_bounds = array<i64: 2>, scalar_prefetch = 0 : i64, scratch_operands = 0 : i64, tpu.core_type = #tpu.core_type<tc>, window_params = [{transform_indices = @transform_0, window_bounds = array<i64: 1, 16, 16, 4>}, {pipeline_mode = #tpu.pipeline_mode<synchronous>, transform_indices = @transform_1, window_bounds = array<i64: 36, 8>}, {pipeline_mode = #tpu.pipeline_mode<synchronous>, transform_indices = @transform_2, window_bounds = array<i64: 1, 8>}, {pipeline_mode = #tpu.pipeline_mode<synchronous>, transform_indices = @transform_3, window_bounds = array<i64: 72, 8>}, {pipeline_mode = #tpu.pipeline_mode<synchronous>, transform_indices = @transform_4, window_bounds = array<i64: 1, 8>}, {transform_indices = @transform_5, window_bounds = array<i64: 1, 16, 16, 8>}]} {
    %c0 = arith.constant 0 : index
    %c0_0 = arith.constant 0 : index
    %0 = vector.load %arg3[%c0, %c0_0] : memref<1x8xf32, #tpu.memory_space<vmem>>, vector<1x8xf32>
    %c0_1 = arith.constant 0 : index
    %c0_2 = arith.constant 0 : index
    %1 = vector.load %arg5[%c0_1, %c0_2] : memref<1x8xf32, #tpu.memory_space<vmem>>, vector<1x8xf32>
    %c0_3 = arith.constant 0 : index
    %c0_4 = arith.constant 0 : index
    %c0_5 = arith.constant 0 : index
    %c0_6 = arith.constant 0 : index
    %2 = vector.load %arg1[%c0_3, %c0_4, %c0_5, %c0_6] : memref<1x16x16x4xbf16, #tpu.memory_space<vmem>>, vector<1x16x16x4xbf16>
    %3 = vector.shape_cast %2 : vector<1x16x16x4xbf16> to vector<16x16x4xbf16>
    %c0_7 = arith.constant 0 : index
    %c0_8 = arith.constant 0 : index
    %4 = vector.load %arg2[%c0_7, %c0_8] : memref<36x8xbf16, #tpu.memory_space<vmem>>, vector<36x8xbf16>
    %cst = arith.constant 0.000000e+00 : bf16
    %5 = vector.broadcast %cst : bf16 to vector<16x1x4xbf16>
    %6 = tpu.concatenate %5, %3, %5 in 1 : vector<16x1x4xbf16>, vector<16x16x4xbf16>, vector<16x1x4xbf16> -> vector<16x18x4xbf16>
    %7 = vector.extract_strided_slice %6 {offsets = [0, 0, 0], sizes = [16, 16, 4], strides = [1, 1, 1]} : vector<16x18x4xbf16> to vector<16x16x4xbf16>
    %8 = vector.extract_strided_slice %6 {offsets = [0, 1, 0], sizes = [16, 16, 4], strides = [1, 1, 1]} : vector<16x18x4xbf16> to vector<16x16x4xbf16>
    %9 = vector.extract_strided_slice %6 {offsets = [0, 2, 0], sizes = [16, 16, 4], strides = [1, 1, 1]} : vector<16x18x4xbf16> to vector<16x16x4xbf16>
    %10 = tpu.concatenate %7, %8, %9 in 2 : vector<16x16x4xbf16>, vector<16x16x4xbf16>, vector<16x16x4xbf16> -> vector<16x16x12xbf16>
    %cst_9 = arith.constant 0.000000e+00 : bf16
    %11 = vector.broadcast %cst_9 : bf16 to vector<1x16x12xbf16>
    %12 = tpu.concatenate %11, %10, %11 in 0 : vector<1x16x12xbf16>, vector<16x16x12xbf16>, vector<1x16x12xbf16> -> vector<18x16x12xbf16>
    %13 = vector.extract_strided_slice %12 {offsets = [0, 0, 0], sizes = [16, 16, 12], strides = [1, 1, 1]} : vector<18x16x12xbf16> to vector<16x16x12xbf16>
    %14 = vector.extract_strided_slice %12 {offsets = [1, 0, 0], sizes = [16, 16, 12], strides = [1, 1, 1]} : vector<18x16x12xbf16> to vector<16x16x12xbf16>
    %15 = vector.extract_strided_slice %12 {offsets = [2, 0, 0], sizes = [16, 16, 12], strides = [1, 1, 1]} : vector<18x16x12xbf16> to vector<16x16x12xbf16>
    %16 = tpu.concatenate %13, %14, %15 in 2 : vector<16x16x12xbf16>, vector<16x16x12xbf16>, vector<16x16x12xbf16> -> vector<16x16x36xbf16>
    %17 = vector.shape_cast %16 : vector<16x16x36xbf16> to vector<256x36xbf16>
    %cst_10 = arith.constant dense<0.000000e+00> : vector<256x8xf32>
    %18 = tpu.matmul %17, %4, %cst_10 {dimension_numbers = #tpu.dot_dimension_numbers<[1], [0], [0], [1], [0, 0, 1, 1], [], []>} : vector<256x36xbf16>, vector<36x8xbf16>, vector<256x8xf32> -> vector<256x8xf32>
    %19 = vector.broadcast %0 : vector<1x8xf32> to vector<256x8xf32>
    %20 = arith.addf %18, %19 : vector<256x8xf32>
    %cst_11 = arith.constant 0.000000e+00 : f32
    %21 = vector.broadcast %cst_11 : f32 to vector<256x8xf32>
    %22 = arith.maximumf %20, %21 : vector<256x8xf32>
    %23 = arith.truncf %22 : vector<256x8xf32> to vector<256x8xbf16>
    %24 = vector.shape_cast %23 : vector<256x8xbf16> to vector<16x16x8xbf16>
    %c0_12 = arith.constant 0 : index
    %c0_13 = arith.constant 0 : index
    %25 = vector.load %arg4[%c0_12, %c0_13] : memref<72x8xbf16, #tpu.memory_space<vmem>>, vector<72x8xbf16>
    %cst_14 = arith.constant 0.000000e+00 : bf16
    %26 = vector.broadcast %cst_14 : bf16 to vector<16x1x8xbf16>
    %27 = tpu.concatenate %26, %24, %26 in 1 : vector<16x1x8xbf16>, vector<16x16x8xbf16>, vector<16x1x8xbf16> -> vector<16x18x8xbf16>
    %28 = vector.extract_strided_slice %27 {offsets = [0, 0, 0], sizes = [16, 16, 8], strides = [1, 1, 1]} : vector<16x18x8xbf16> to vector<16x16x8xbf16>
    %29 = vector.extract_strided_slice %27 {offsets = [0, 1, 0], sizes = [16, 16, 8], strides = [1, 1, 1]} : vector<16x18x8xbf16> to vector<16x16x8xbf16>
    %30 = vector.extract_strided_slice %27 {offsets = [0, 2, 0], sizes = [16, 16, 8], strides = [1, 1, 1]} : vector<16x18x8xbf16> to vector<16x16x8xbf16>
    %31 = tpu.concatenate %28, %29, %30 in 2 : vector<16x16x8xbf16>, vector<16x16x8xbf16>, vector<16x16x8xbf16> -> vector<16x16x24xbf16>
    %cst_15 = arith.constant 0.000000e+00 : bf16
    %32 = vector.broadcast %cst_15 : bf16 to vector<1x16x24xbf16>
    %33 = tpu.concatenate %32, %31, %32 in 0 : vector<1x16x24xbf16>, vector<16x16x24xbf16>, vector<1x16x24xbf16> -> vector<18x16x24xbf16>
    %34 = vector.extract_strided_slice %33 {offsets = [0, 0, 0], sizes = [16, 16, 24], strides = [1, 1, 1]} : vector<18x16x24xbf16> to vector<16x16x24xbf16>
    %35 = vector.extract_strided_slice %33 {offsets = [1, 0, 0], sizes = [16, 16, 24], strides = [1, 1, 1]} : vector<18x16x24xbf16> to vector<16x16x24xbf16>
    %36 = vector.extract_strided_slice %33 {offsets = [2, 0, 0], sizes = [16, 16, 24], strides = [1, 1, 1]} : vector<18x16x24xbf16> to vector<16x16x24xbf16>
    %37 = tpu.concatenate %34, %35, %36 in 2 : vector<16x16x24xbf16>, vector<16x16x24xbf16>, vector<16x16x24xbf16> -> vector<16x16x72xbf16>
    %38 = vector.shape_cast %37 : vector<16x16x72xbf16> to vector<256x72xbf16>
    %cst_16 = arith.constant dense<0.000000e+00> : vector<256x8xf32>
    %39 = tpu.matmul %38, %25, %cst_16 {dimension_numbers = #tpu.dot_dimension_numbers<[1], [0], [0], [1], [0, 0, 1, 1], [], []>} : vector<256x72xbf16>, vector<72x8xbf16>, vector<256x8xf32> -> vector<256x8xf32>
    %40 = vector.broadcast %1 : vector<1x8xf32> to vector<256x8xf32>
    %41 = arith.addf %39, %40 : vector<256x8xf32>
    %cst_17 = arith.constant 0.000000e+00 : f32
    %42 = vector.broadcast %cst_17 : f32 to vector<256x8xf32>
    %43 = arith.maximumf %41, %42 : vector<256x8xf32>
    %44 = vector.shape_cast %43 : vector<256x8xf32> to vector<1x16x16x8xf32>
    %c0_18 = arith.constant 0 : index
    %c0_19 = arith.constant 0 : index
    %c0_20 = arith.constant 0 : index
    %c0_21 = arith.constant 0 : index
    %45 = vector.load %arg6[%c0_18, %c0_19, %c0_20, %c0_21] : memref<1x16x16x8xf32, #tpu.memory_space<vmem>>, vector<1x16x16x8xf32>
    tpu.vector_store %arg6[%c0_18, %c0_19, %c0_20, %c0_21], %44 {strides = array<i32>} : memref<1x16x16x8xf32, #tpu.memory_space<vmem>>, vector<1x16x16x8xf32>,
    return
  }
  func.func @transform_0(%arg0: i32) -> (i32, i32, i32, i32) {
    %c0_i32 = arith.constant 0 : i32
    %c0_i32_0 = arith.constant 0 : i32
    %c0_i32_1 = arith.constant 0 : i32
    %c0_i32_2 = arith.constant 0 : i32
    return %arg0, %c0_i32, %c0_i32_0, %c0_i32_1 : i32, i32, i32, i32
  }
  func.func @transform_1(%arg0: i32) -> (i32, i32) {
    %c0_i32 = arith.constant 0 : i32
    %c0_i32_0 = arith.constant 0 : i32
    %c0_i32_1 = arith.constant 0 : i32
    return %c0_i32, %c0_i32_0 : i32, i32
  }
  func.func @transform_2(%arg0: i32) -> (i32, i32) {
    %c0_i32 = arith.constant 0 : i32
    %c0_i32_0 = arith.constant 0 : i32
    %c0_i32_1 = arith.constant 0 : i32
    return %c0_i32, %c0_i32_0 : i32, i32
  }
  func.func @transform_3(%arg0: i32) -> (i32, i32) {
    %c0_i32 = arith.constant 0 : i32
    %c0_i32_0 = arith.constant 0 : i32
    %c0_i32_1 = arith.constant 0 : i32
    return %c0_i32, %c0_i32_0 : i32, i32
  }
  func.func @transform_4(%arg0: i32) -> (i32, i32) {
    %c0_i32 = arith.constant 0 : i32
    %c0_i32_0 = arith.constant 0 : i32
    %c0_i32_1 = arith.constant 0 : i32
    return %c0_i32, %c0_i32_0 : i32, i32
  }
  func.func @transform_5(%arg0: i32) -> (i32, i32, i32, i32) {
    %c0_i32 = arith.constant 0 : i32
    %c0_i32_0 = arith.constant 0 : i32
    %c0_i32_1 = arith.constant 0 : i32
    %c0_i32_2 = arith.constant 0 : i32
    return %arg0, %c0_i32, %c0_i32_0, %c0_i32_1 : i32, i32, i32, i32
  }
}

</mosaic_0001>

<llo_original>
// kernel: double_conv_forward.1
$region0: #{double_conv_forward.1}
  #allocation0 [shape = 'u32[]', space=smem, size = 0x4, offset = 0x4, fixed_abs, tag = 'smem constant byte address 0x4 - core index']
  #allocation1 [shape = 'u32[144,128]{1,0:T(1,128)}', space=vmem, size = 0x12000, scoped, tag = 'internal scratch']
  %s0 = inlined_call_operand.vmem [shape: bf16[2,16,16,4], index: 0, kind: input, shape index: {}]
  %s1 = inlined_call_operand.vmem [shape: bf16[36,8], index: 1, kind: input, shape index: {}]
  %s2 = inlined_call_operand.vmem [shape: f32[1,8], index: 2, kind: input, shape index: {}]
  %s3 = inlined_call_operand.vmem [shape: bf16[72,8], index: 3, kind: input, shape index: {}]
  %s4 = inlined_call_operand.vmem [shape: f32[1,8], index: 4, kind: input, shape index: {}]
  %s5 = inlined_call_operand.vmem [shape: f32[2,16,16,8], index: 5, kind: output, shape index: {}]
  %s6 = sld [smem:[#allocation0]]
  $region53: #{double_conv_forward.1} parent=0
    _
  %s8 = ssub.s32 1, %s6
  %s9 = scalar_select 0, %s8, %s6
  loop: start=0, step=1, limit=4
  $region2: #{double_conv_forward.1} parent=0 // loop_pre_header
    _
  $region3: #{double_conv_forward.1} parent=0 // loop_header
    %s11 = sphi 0, %s15
    %p12 = scmp.ge.s32.totalorder %s11, 4
    %s21 = sphi 0, %s23
    %s24 = sphi 0, %s21
    %s25 = sphi 0, %s24
    %s41 = sphi 0, %s25
    %s45 = sphi 0, %s45
    %s47 = sphi 0, %s45
    %s48 = sphi 0, %s47
    %s62 = sphi 0, %s48
    %s66 = sphi 0, %s66
    %s68 = sphi 0, %s66
    %s69 = sphi 0, %s68
    %s83 = sphi 0, %s69
    %s87 = sphi 0, %s87
    %s89 = sphi 0, %s87
    %s90 = sphi 0, %s89
    %s104 = sphi 0, %s90
    %s108 = sphi 0, %s108
    %s110 = sphi 0, %s108
    %s111 = sphi 0, %s110
    %s125 = sphi 0, %s111
    %s131 = sphi 0, %s133
    %s134 = sphi 0, %s131
    %s135 = sphi 0, %s134
    %s151 = sphi 0, %s135
  $region4: #{double_conv_forward.1} parent=0 // loop_header_branch
    %14 = sbr.rel (%p12) target = $region8
  $region5: #{double_conv_forward.1} parent=0 // loop_body
    %s16 = ssub.s32 %s11, 1
    %s17 = ssub.s32 %s11, 2
    %s18 = sadd.s32 %s11, 1
    %s19 = ssub.s32 %s11, %s18
    %p20 = scmp.eq.s32.totalorder %s19, 0
    %s22 = sadd.s32 %s21, 1
    %s23 = scalar_select %p20, %s21, %s22
    %p26 = pneg %p20
    %p27 = scmp.eq.s32.totalorder %s11, 1
    %p28 = por %p26, %p27
    %p29 = scmp.ne.s32.totalorder %s21, %s24
    %p30 = scmp.eq.s32.totalorder %s11, 0
    %p31 = por %p29, %p30
    %p32 = scmp.ne.s32.totalorder %s21, %s24
    %p33 = scmp.eq.s32.totalorder %s16, 1
    %p34 = por %p32, %p33
    %p35 = scmp.ne.s32.totalorder %s24, %s25
    %p36 = scmp.eq.s32.totalorder %s16, 0
    %p37 = por %p35, %p36
    %p38 = scmp.ne.s32.totalorder %s24, %s25
    %p39 = scmp.eq.s32.totalorder %s17, 1
    %p40 = por %p38, %p39
    %p42 = scmp.ne.s32.totalorder %s25, %s41
    %p43 = scmp.eq.s32.totalorder %s17, 0
    %p44 = por %p42, %p43
    %s46 = sadd.s32 %s45, 1
    %p49 = scmp.eq.s32.totalorder %s11, 1
    %p50 = scmp.ne.s32.totalorder %s45, %s47
    %p51 = scmp.eq.s32.totalorder %s11, 0
    %p52 = por %p50, %p51
    %p53 = scmp.ne.s32.totalorder %s45, %s47
    %p54 = scmp.eq.s32.totalorder %s16, 1
    %p55 = por %p53, %p54
    %p56 = scmp.ne.s32.totalorder %s47, %s48
    %p57 = scmp.eq.s32.totalorder %s16, 0
    %p58 = por %p56, %p57
    %p59 = scmp.ne.s32.totalorder %s47, %s48
    %p60 = scmp.eq.s32.totalorder %s17, 1
    %p61 = por %p59, %p60
    %p63 = scmp.ne.s32.totalorder %s48, %s62
    %p64 = scmp.eq.s32.totalorder %s17, 0
    %p65 = por %p63, %p64
    %s67 = sadd.s32 %s66, 1
    %p70 = scmp.eq.s32.totalorder %s11, 1
    %p71 = scmp.ne.s32.totalorder %s66, %s68
    %p72 = scmp.eq.s32.totalorder %s11, 0
    %p73 = por %p71, %p72
    %p74 = scmp.ne.s32.totalorder %s66, %s68
    %p75 = scmp.eq.s32.totalorder %s16, 1
    %p76 = por %p74, %p75
    %p77 = scmp.ne.s32.totalorder %s68, %s69
    %p78 = scmp.eq.s32.totalorder %s16, 0
    %p79 = por %p77, %p78
    %p80 = scmp.ne.s32.totalorder %s68, %s69
    %p81 = scmp.eq.s32.totalorder %s17, 1
    %p82 = por %p80, %p81
    %p84 = scmp.ne.s32.totalorder %s69, %s83
    %p85 = scmp.eq.s32.totalorder %s17, 0
    %p86 = por %p84, %p85
    %s88 = sadd.s32 %s87, 1
    %p91 = scmp.eq.s32.totalorder %s11, 1
    %p92 = scmp.ne.s32.totalorder %s87, %s89
    %p93 = scmp.eq.s32.totalorder %s11, 0
    %p94 = por %p92, %p93
    %p95 = scmp.ne.s32.totalorder %s87, %s89
    %p96 = scmp.eq.s32.totalorder %s16, 1
    %p97 = por %p95, %p96
    %p98 = scmp.ne.s32.totalorder %s89, %s90
    %p99 = scmp.eq.s32.totalorder %s16, 0
    %p100 = por %p98, %p99
    %p101 = scmp.ne.s32.totalorder %s89, %s90
    %p102 = scmp.eq.s32.totalorder %s17, 1
    %p103 = por %p101, %p102
    %p105 = scmp.ne.s32.totalorder %s90, %s104
    %p106 = scmp.eq.s32.totalorder %s17, 0
    %p107 = por %p105, %p106
    %s109 = sadd.s32 %s108, 1
    %p112 = scmp.eq.s32.totalorder %s11, 1
    %p113 = scmp.ne.s32.totalorder %s108, %s110
    %p114 = scmp.eq.s32.totalorder %s11, 0
    %p115 = por %p113, %p114
    %p116 = scmp.ne.s32.totalorder %s108, %s110
    %p117 = scmp.eq.s32.totalorder %s16, 1
    %p118 = por %p116, %p117
    %p119 = scmp.ne.s32.totalorder %s110, %s111
    %p120 = scmp.eq.s32.totalorder %s16, 0
    %p121 = por %p119, %p120
    %p122 = scmp.ne.s32.totalorder %s110, %s111
    %p123 = scmp.eq.s32.totalorder %s17, 1
    %p124 = por %p122, %p123
    %p126 = scmp.ne.s32.totalorder %s111, %s125
    %p127 = scmp.eq.s32.totalorder %s17, 0
    %p128 = por %p126, %p127
    %s129 = ssub.s32 %s11, %s18
    %p130 = scmp.eq.s32.totalorder %s129, 0
    %s132 = sadd.s32 %s131, 1
    %s133 = scalar_select %p130, %s131, %s132
    %p136 = pneg %p130
    %p137 = scmp.eq.s32.totalorder %s11, 1
    %p138 = por %p136, %p137
    %p139 = scmp.ne.s32.totalorder %s131, %s134
    %p140 = scmp.eq.s32.totalorder %s11, 0
    %p141 = por %p139, %p140
    %p142 = scmp.ne.s32.totalorder %s131, %s134
    %p143 = scmp.eq.s32.totalorder %s16, 1
    %p144 = por %p142, %p143
    %p145 = scmp.ne.s32.totalorder %s134, %s135
    %p146 = scmp.eq.s32.totalorder %s16, 0
    %p147 = por %p145, %p146
    %p148 = scmp.ne.s32.totalorder %s134, %s135
    %p149 = scmp.eq.s32.totalorder %s17, 1
    %p150 = por %p148, %p149
    %p152 = scmp.ne.s32.totalorder %s135, %s151
    %p153 = scmp.eq.s32.totalorder %s17, 0
    %p154 = por %p152, %p153
    %p155 = scmp.le.s32.totalorder 1, %s11
    %p156 = scmp.lt.s32.totalorder %s11, 3
    %p157 = pnand %p155, %p156
    %p158 = pneg %p157
    // Predicated region
    $region9: #{double_conv_forward.1} parent=5 // pred_check
      _
    $region10: #{double_conv_forward.1} parent=5 // pred_check_branch
      %160 = sbr.rel (%p157) target = $region12
    $region11: #{double_conv_forward.1} parent=5 // pred_region
      %s161 = ssub.s32 %s11, 1
      // Predicated region
      $region13: #{double_conv_forward.1} parent=11 // pred_check
        %p162 = pneg %p58
      $region14: #{double_conv_forward.1} parent=11 // pred_check_branch
        %164 = sbr.rel (%p162) target = $region16
      $region15: #{double_conv_forward.1} parent=11 // pred_region
        _
      $region16: #{double_conv_forward.1} parent=11 // pred_fallthru
        _
      // Predicated region
      $region17: #{double_conv_forward.1} parent=11 // pred_check
        %p165 = pneg %p79
      $region18: #{double_conv_forward.1} parent=11 // pred_check_branch
        %167 = sbr.rel (%p165) target = $region20
      $region19: #{double_conv_forward.1} parent=11 // pred_region
        _
      $region20: #{double_conv_forward.1} parent=11 // pred_fallthru
        _
      // Predicated region
      $region21: #{double_conv_forward.1} parent=11 // pred_check
        %p168 = pneg %p100
      $region22: #{double_conv_forward.1} parent=11 // pred_check_branch
        %170 = sbr.rel (%p168) target = $region24
      $region23: #{double_conv_forward.1} parent=11 // pred_region
        _
      $region24: #{double_conv_forward.1} parent=11 // pred_fallthru
        _
      // Predicated region
      $region25: #{double_conv_forward.1} parent=11 // pred_check
        %p171 = pneg %p121
      $region26: #{double_conv_forward.1} parent=11 // pred_check_branch
        %173 = sbr.rel (%p171) target = $region28
      $region27: #{double_conv_forward.1} parent=11 // pred_region
        _
      $region28: #{double_conv_forward.1} parent=11 // pred_fallthru
        _
    $region12: #{double_conv_forward.1} parent=5 // pred_fallthru
      _
    %p174 = scmp.lt.s32.totalorder %s11, 2
    // Predicated region
    $region29: #{double_conv_forward.1} parent=5 // pred_check
      %p175 = pneg %p174
    $region30: #{double_conv_forward.1} parent=5 // pred_check_branch
      %177 = sbr.rel (%p175) target = $region32
    $region31: #{double_conv_forward.1} parent=5 // pred_region
      // Predicated region
      $region33: #{double_conv_forward.1} parent=31 // pred_check
        %p178 = pneg %p31
      $region34: #{double_conv_forward.1} parent=31 // pred_check_branch
        %180 = sbr.rel (%p178) target = $region36
      $region35: #{double_conv_forward.1} parent=31 // pred_region
        %p181 = scmp.lt.s32.totalorder %s11, 1
        %s182 = scalar_select %p181, %s11, 1
        %s183 = smul.addr %s182, 32
        %s184 = smul.addr %s183, 4
        %s185 = scalar_lea.vmem %s0, %s184
      $region36: #{double_conv_forward.1} parent=31 // pred_fallthru
        _
    $region32: #{double_conv_forward.1} parent=5 // pred_fallthru
      _
    %p186 = scmp.le.s32.totalorder 1, %s11
    %p187 = scmp.lt.s32.totalorder %s11, 3
    %p188 = pnand %p186, %p187
    %p189 = pneg %p188
    // Predicated region
    $region37: #{double_conv_forward.1} parent=5 // pred_check
      _
    $region38: #{double_conv_forward.1} parent=5 // pred_check_branch
      %191 = sbr.rel (%p188) target = $region40
    $region39: #{double_conv_forward.1} parent=5 // pred_region
      %s192 = ssub.s32 %s11, 1
      %p193 = scmp.lt.s32.totalorder %s16, 1
      %s194 = scalar_select %p193, %s16, 1
      %s195 = smul.addr %s194, 32
      %s196 = smul.addr %s195, 4
      %s197 = scalar_lea.vmem %s0, %s196
      %p198 = pneg %p37
      %p199 = pneg %p34
      %p200 = pneg %p58
      %p201 = pneg %p55
      %p202 = pneg %p79
      %p203 = pneg %p76
      %p204 = pneg %p100
      %p205 = pneg %p97
      %p206 = pneg %p121
      %p207 = pneg %p118
      %p208 = pneg %p147
      %p209 = pneg %p144
      %p210 = scmp.lt.s32.totalorder %s16, 1
      %s211 = scalar_select %p210, %s16, 1
      %s212 = smul.addr %s211, 32
      %s213 = smul.addr %s212, 8
      %s214 = scalar_lea.vmem %s5, %s213
      %p215 = scmp.lt.s32.totalorder %s16, 1
      %s216 = scalar_select %p215, %s16, 1
      %s217 = smul.addr %s216, 32
      %s218 = smul.addr %s217, 4
      %s219 = scalar_lea.vmem %s0, %s218
      %p220 = scmp.lt.s32.totalorder %s16, 1
      %s221 = scalar_select %p220, %s16, 1
      %s222 = smul.addr %s221, 32
      %s223 = smul.addr %s222, 8
      %s224 = scalar_lea.vmem %s5, %s223
      %v226 = vld [vmem:[%s2] sm:$0x1]
      %v227 = vld [vmem:[%s4] sm:$0x1]
      %v228 = vld [vmem:[%s219] sm:$0xf]
      %v229 = vld [vmem:[%s219 + $0x4] sm:$0xf]
      %v230 = vld [vmem:[%s219 + $0x8] sm:$0xf]
      %v231 = vld [vmem:[%s219 + $0xc] sm:$0xf]
      %v232 = vld [vmem:[%s219 + $0x10] sm:$0xf]
      %v233 = vld [vmem:[%s219 + $0x14] sm:$0xf]
      %v234 = vld [vmem:[%s219 + $0x18] sm:$0xf]
      %v235 = vld [vmem:[%s219 + $0x1c] sm:$0xf]
      %v236 = vld [vmem:[%s219 + $0x20] sm:$0xf]
      %v237 = vld [vmem:[%s219 + $0x24] sm:$0xf]
      %v238 = vld [vmem:[%s219 + $0x28] sm:$0xf]
      %v239 = vld [vmem:[%s219 + $0x2c] sm:$0xf]
      %v240 = vld [vmem:[%s219 + $0x30] sm:$0xf]
      %v241 = vld [vmem:[%s219 + $0x34] sm:$0xf]
      %v242 = vld [vmem:[%s219 + $0x38] sm:$0xf]
      %v243 = vld [vmem:[%s219 + $0x3c] sm:$0xf]
      %v244 = vld [vmem:[%s219 + $0x40] sm:$0xf]
      %v245 = vld [vmem:[%s219 + $0x44] sm:$0xf]
      %v246 = vld [vmem:[%s219 + $0x48] sm:$0xf]
      %v247 = vld [vmem:[%s219 + $0x4c] sm:$0xf]
      %v248 = vld [vmem:[%s219 + $0x50] sm:$0xf]
      %v249 = vld [vmem:[%s219 + $0x54] sm:$0xf]
      %v250 = vld [vmem:[%s219 + $0x58] sm:$0xf]
      %v251 = vld [vmem:[%s219 + $0x5c] sm:$0xf]
      %v252 = vld [vmem:[%s219 + $0x60] sm:$0xf]
      %v253 = vld [vmem:[%s219 + $0x64] sm:$0xf]
      %v254 = vld [vmem:[%s219 + $0x68] sm:$0xf]
      %v255 = vld [vmem:[%s219 + $0x6c] sm:$0xf]
      %v256 = vld [vmem:[%s219 + $0x70] sm:$0xf]
      %v257 = vld [vmem:[%s219 + $0x74] sm:$0xf]
      %v258 = vld [vmem:[%s219 + $0x78] sm:$0xf]
      %v259 = vld [vmem:[%s219 + $0x7c] sm:$0xf]
      %v260 = vld [vmem:[%s1] sm:$0xf]
      %v261 = vld [vmem:[%s1 + $0x4] sm:$0xf]
      %v262 = vld [vmem:[%s1 + $0x8] sm:$0xf]
      %v263 = vld [vmem:[%s1 + $0xc] sm:$0xf]
      %v264 = vld [vmem:[%s1 + $0x10] sm:$0x3]
      %v297 = vunpack.c.l.b16 %v228
      %v298 = vunpack.c.l.b16 %v229
      %v299 = vunpack.c.l.b16 %v230
      %v300 = vunpack.c.l.b16 %v231
      %v301 = vunpack.c.l.b16 %v232
      %v302 = vunpack.c.l.b16 %v233
      %v303 = vunpack.c.l.b16 %v234
      %v304 = vunpack.c.l.b16 %v235
      %v305 = vunpack.c.l.b16 %v236
      %v306 = vunpack.c.l.b16 %v237
      %v307 = vunpack.c.l.b16 %v238
      %v308 = vunpack.c.l.b16 %v239
      %v309 = vunpack.c.l.b16 %v240
      %v310 = vunpack.c.l.b16 %v241
      %v311 = vunpack.c.l.b16 %v242
      %v312 = vunpack.c.l.b16 %v243
      %v313 = vunpack.c.l.b16 %v244
      %v314 = vunpack.c.l.b16 %v245
      %v315 = vunpack.c.l.b16 %v246
      %v316 = vunpack.c.l.b16 %v247
      %v317 = vunpack.c.l.b16 %v248
      %v318 = vunpack.c.l.b16 %v249
      %v319 = vunpack.c.l.b16 %v250
      %v320 = vunpack.c.l.b16 %v251
      %v321 = vunpack.c.l.b16 %v252
      %v322 = vunpack.c.l.b16 %v253
      %v323 = vunpack.c.l.b16 %v254
      %v324 = vunpack.c.l.b16 %v255
      %v325 = vunpack.c.l.b16 %v256
      %v326 = vunpack.c.l.b16 %v257
      %v327 = vunpack.c.l.b16 %v258
      %v328 = vunpack.c.l.b16 %v259
      %v329 = vpack.c.b16 %v298, %v297
      %v330 = vpack.c.b16 %v300, %v299
      %v331 = vpack.c.b16 %v302, %v301
      %v332 = vpack.c.b16 %v304, %v303
      %v333 = vpack.c.b16 %v306, %v305
      %v334 = vpack.c.b16 %v308, %v307
      %v335 = vpack.c.b16 %v310, %v309
      %v336 = vpack.c.b16 %v312, %v311
      %v337 = vpack.c.b16 %v314, %v313
      %v338 = vpack.c.b16 %v316, %v315
      %v339 = vpack.c.b16 %v318, %v317
      %v340 = vpack.c.b16 %v320, %v319
      %v341 = vpack.c.b16 %v322, %v321
      %v342 = vpack.c.b16 %v324, %v323
      %v343 = vpack.c.b16 %v326, %v325
      %v344 = vpack.c.b16 %v328, %v327
      %v346 = vshrl.u32 %v329, 16
      %v348 = vrot.slane %v346, 7
      %v349 = vshll.u32 %v329, 16
      %v351 = vor.u32 %v348, %v349
      %v353 = vshrl.u32 %v330, 16
      %v355 = vrot.slane %v353, 7
      %v356 = vshll.u32 %v330, 16
      %v358 = vor.u32 %v355, %v356
      %v360 = vshrl.u32 %v331, 16
      %v362 = vrot.slane %v360, 7
      %v363 = vshll.u32 %v331, 16
      %v365 = vor.u32 %v362, %v363
      %v367 = vshrl.u32 %v332, 16
      %v369 = vrot.slane %v367, 7
      %v370 = vshll.u32 %v332, 16
      %v372 = vor.u32 %v369, %v370
      %v374 = vshrl.u32 %v333, 16
      %v376 = vrot.slane %v374, 7
      %v377 = vshll.u32 %v333, 16
      %v379 = vor.u32 %v376, %v377
      %v381 = vshrl.u32 %v334, 16
      %v383 = vrot.slane %v381, 7
      %v384 = vshll.u32 %v334, 16
      %v386 = vor.u32 %v383, %v384
      %v388 = vshrl.u32 %v335, 16
      %v390 = vrot.slane %v388, 7
      %v391 = vshll.u32 %v335, 16
      %v393 = vor.u32 %v390, %v391
      %v395 = vshrl.u32 %v336, 16
      %v397 = vrot.slane %v395, 7
      %v398 = vshll.u32 %v336, 16
      %v400 = vor.u32 %v397, %v398
      %v402 = vshrl.u32 %v337, 16
      %v404 = vrot.slane %v402, 7
      %v405 = vshll.u32 %v337, 16
      %v407 = vor.u32 %v404, %v405
      %v409 = vshrl.u32 %v338, 16
      %v411 = vrot.slane %v409, 7
      %v412 = vshll.u32 %v338, 16
      %v414 = vor.u32 %v411, %v412
      %v416 = vshrl.u32 %v339, 16
      %v418 = vrot.slane %v416, 7
      %v419 = vshll.u32 %v339, 16
      %v421 = vor.u32 %v418, %v419
      %v423 = vshrl.u32 %v340, 16
      %v425 = vrot.slane %v423, 7
      %v426 = vshll.u32 %v340, 16
      %v428 = vor.u32 %v425, %v426
      %v430 = vshrl.u32 %v341, 16
      %v432 = vrot.slane %v430, 7
      %v433 = vshll.u32 %v341, 16
      %v435 = vor.u32 %v432, %v433
      %v437 = vshrl.u32 %v342, 16
      %v439 = vrot.slane %v437, 7
      %v440 = vshll.u32 %v342, 16
      %v442 = vor.u32 %v439, %v440
      %v444 = vshrl.u32 %v343, 16
      %v446 = vrot.slane %v444, 7
      %v447 = vshll.u32 %v343, 16
      %v449 = vor.u32 %v446, %v447
      %v451 = vshrl.u32 %v344, 16
      %v453 = vrot.slane %v451, 7
      %v454 = vshll.u32 %v344, 16
      %v456 = vor.u32 %v453, %v454
      %vm489 = vcmask 1040384
      %vm490 = vsmask.f32 256
      %vm491 = vmand %vm489, %vm490
      %v492 = vsel %vm491, 0, %v351
      %v493 = vsel %vm491, 0, %v358
      %v494 = vsel %vm491, 0, %v365
      %v495 = vsel %vm491, 0, %v372
      %v496 = vsel %vm491, 0, %v379
      %v497 = vsel %vm491, 0, %v386
      %v498 = vsel %vm491, 0, %v393
      %v499 = vsel %vm491, 0, %v400
      %v500 = vsel %vm491, 0, %v407
      %v501 = vsel %vm491, 0, %v414
      %v502 = vsel %vm491, 0, %v421
      %v503 = vsel %vm491, 0, %v428
      %v504 = vsel %vm491, 0, %v435
      %v505 = vsel %vm491, 0, %v442
      %v506 = vsel %vm491, 0, %v449
      %v507 = vsel %vm491, 0, %v456
      %v508 = vsel %vm491, %v348, 0
      %v509 = vsel %vm491, %v355, 0
      %v510 = vsel %vm491, %v362, 0
      %v511 = vsel %vm491, %v369, 0
      %v512 = vsel %vm491, %v376, 0
      %v513 = vsel %vm491, %v383, 0
      %v514 = vsel %vm491, %v390, 0
      %v515 = vsel %vm491, %v397, 0
      %v516 = vsel %vm491, %v404, 0
      %v517 = vsel %vm491, %v411, 0
      %v518 = vsel %vm491, %v418, 0
      %v519 = vsel %vm491, %v425, 0
      %v520 = vsel %vm491, %v432, 0
      %v521 = vsel %vm491, %v439, 0
      %v522 = vsel %vm491, %v446, 0
      %v523 = vsel %vm491, %v453, 0
      %vm524 = vsmask.f32 7424
      %v526 = vshrl.u32 %v492, 16
      %v528 = vshll.u32 %v492, 16
      %v530 = vrot.slane %v528, 1
      %v531 = vor.u32 %v526, %v530
      %v533 = vshll.u32 %v508, 16
      %v535 = vrot.slane %v533, 1
      %v536 = vsel %vm524, %v531, %v535
      %v538 = vshrl.u32 %v493, 16
      %v540 = vshll.u32 %v493, 16
      %v542 = vrot.slane %v540, 1
      %v543 = vor.u32 %v538, %v542
      %v545 = vshll.u32 %v509, 16
      %v547 = vrot.slane %v545, 1
      %v548 = vsel %vm524, %v543, %v547
      %v550 = vshrl.u32 %v494, 16
      %v552 = vshll.u32 %v494, 16
      %v554 = vrot.slane %v552, 1
      %v555 = vor.u32 %v550, %v554
      %v557 = vshll.u32 %v510, 16
      %v559 = vrot.slane %v557, 1
      %v560 = vsel %vm524, %v555, %v559
      %v562 = vshrl.u32 %v495, 16
      %v564 = vshll.u32 %v495, 16
      %v566 = vrot.slane %v564, 1
      %v567 = vor.u32 %v562, %v566
      %v569 = vshll.u32 %v511, 16
      %v571 = vrot.slane %v569, 1
      %v572 = vsel %vm524, %v567, %v571
      %v574 = vshrl.u32 %v496, 16
      %v576 = vshll.u32 %v496, 16
      %v578 = vrot.slane %v576, 1
      %v579 = vor.u32 %v574, %v578
      %v581 = vshll.u32 %v512, 16
      %v583 = vrot.slane %v581, 1
      %v584 = vsel %vm524, %v579, %v583
      %v586 = vshrl.u32 %v497, 16
      %v588 = vshll.u32 %v497, 16
      %v590 = vrot.slane %v588, 1
      %v591 = vor.u32 %v586, %v590
      %v593 = vshll.u32 %v513, 16
      %v595 = vrot.slane %v593, 1
      %v596 = vsel %vm524, %v591, %v595
      %v598 = vshrl.u32 %v498, 16
      %v600 = vshll.u32 %v498, 16
      %v602 = vrot.slane %v600, 1
      %v603 = vor.u32 %v598, %v602
      %v605 = vshll.u32 %v514, 16
      %v607 = vrot.slane %v605, 1
      %v608 = vsel %vm524, %v603, %v607
      %v610 = vshrl.u32 %v499, 16
      %v612 = vshll.u32 %v499, 16
      %v614 = vrot.slane %v612, 1
      %v615 = vor.u32 %v610, %v614
      %v617 = vshll.u32 %v515, 16
      %v619 = vrot.slane %v617, 1
      %v620 = vsel %vm524, %v615, %v619
      %v622 = vshrl.u32 %v500, 16
      %v624 = vshll.u32 %v500, 16
      %v626 = vrot.slane %v624, 1
      %v627 = vor.u32 %v622, %v626
      %v629 = vshll.u32 %v516, 16
      %v631 = vrot.slane %v629, 1
      %v632 = vsel %vm524, %v627, %v631
      %v634 = vshrl.u32 %v501, 16
      %v636 = vshll.u32 %v501, 16
      %v638 = vrot.slane %v636, 1
      %v639 = vor.u32 %v634, %v638
      %v641 = vshll.u32 %v517, 16
      %v643 = vrot.slane %v641, 1
      %v644 = vsel %vm524, %v639, %v643
      %v646 = vshrl.u32 %v502, 16
      %v648 = vshll.u32 %v502, 16
      %v650 = vrot.slane %v648, 1
      %v651 = vor.u32 %v646, %v650
      %v653 = vshll.u32 %v518, 16
      %v655 = vrot.slane %v653, 1
      %v656 = vsel %vm524, %v651, %v655
      %v658 = vshrl.u32 %v503, 16
      %v660 = vshll.u32 %v503, 16
      %v662 = vrot.slane %v660, 1
      %v663 = vor.u32 %v658, %v662
      %v665 = vshll.u32 %v519, 16
      %v667 = vrot.slane %v665, 1
      %v668 = vsel %vm524, %v663, %v667
      %v670 = vshrl.u32 %v504, 16
      %v672 = vshll.u32 %v504, 16
      %v674 = vrot.slane %v672, 1
      %v675 = vor.u32 %v670, %v674
      %v677 = vshll.u32 %v520, 16
      %v679 = vrot.slane %v677, 1
      %v680 = vsel %vm524, %v675, %v679
      %v682 = vshrl.u32 %v505, 16
      %v684 = vshll.u32 %v505, 16
      %v686 = vrot.slane %v684, 1
      %v687 = vor.u32 %v682, %v686
      %v689 = vshll.u32 %v521, 16
      %v691 = vrot.slane %v689, 1
      %v692 = vsel %vm524, %v687, %v691
      %v694 = vshrl.u32 %v506, 16
      %v696 = vshll.u32 %v506, 16
      %v698 = vrot.slane %v696, 1
      %v699 = vor.u32 %v694, %v698
      %v701 = vshll.u32 %v522, 16
      %v703 = vrot.slane %v701, 1
      %v704 = vsel %vm524, %v699, %v703
      %v706 = vshrl.u32 %v507, 16
      %v708 = vshll.u32 %v507, 16
      %v710 = vrot.slane %v708, 1
      %v711 = vor.u32 %v706, %v710
      %v713 = vshll.u32 %v523, 16
      %v715 = vrot.slane %v713, 1
      %v716 = vsel %vm524, %v711, %v715
      %717 = vrot.lane.b32.xlu0 %v536, 4
      %v718 = vpop.permute.xlu0 %717
      %719 = vrot.lane.b32.xlu0 %v548, 4
      %v720 = vpop.permute.xlu0 %719
      %721 = vrot.lane.b32.xlu0 %v560, 4
      %v722 = vpop.permute.xlu0 %721
      %723 = vrot.lane.b32.xlu0 %v572, 4
      %v724 = vpop.permute.xlu0 %723
      %725 = vrot.lane.b32.xlu0 %v584, 4
      %v726 = vpop.permute.xlu0 %725
      %727 = vrot.lane.b32.xlu0 %v596, 4
      %v728 = vpop.permute.xlu0 %727
      %729 = vrot.lane.b32.xlu0 %v608, 4
      %v730 = vpop.permute.xlu0 %729
      %731 = vrot.lane.b32.xlu0 %v620, 4
      %v732 = vpop.permute.xlu0 %731
      %733 = vrot.lane.b32.xlu0 %v632, 4
      %v734 = vpop.permute.xlu0 %733
      %735 = vrot.lane.b32.xlu0 %v644, 4
      %v736 = vpop.permute.xlu0 %735
      %737 = vrot.lane.b32.xlu0 %v656, 4
      %v738 = vpop.permute.xlu0 %737
      %739 = vrot.lane.b32.xlu0 %v668, 4
      %v740 = vpop.permute.xlu0 %739
      %741 = vrot.lane.b32.xlu0 %v680, 4
      %v742 = vpop.permute.xlu0 %741
      %743 = vrot.lane.b32.xlu0 %v692, 4
      %v744 = vpop.permute.xlu0 %743
      %745 = vrot.lane.b32.xlu0 %v704, 4
      %v746 = vpop.permute.xlu0 %745
      %747 = vrot.lane.b32.xlu0 %v716, 4
      %v748 = vpop.permute.xlu0 %747
      %vm781 = vcmask 1046528
      %v782 = vrot.slane %v492, 1
      %v783 = vrot.slane %v508, 1
      %v784 = vsel %vm781, %v782, %v783
      %v785 = vrot.slane %v493, 1
      %v786 = vrot.slane %v509, 1
      %v787 = vsel %vm781, %v785, %v786
      %v788 = vrot.slane %v494, 1
      %v789 = vrot.slane %v510, 1
      %v790 = vsel %vm781, %v788, %v789
      %v791 = vrot.slane %v495, 1
      %v792 = vrot.slane %v511, 1
      %v793 = vsel %vm781, %v791, %v792
      %v794 = vrot.slane %v496, 1
      %v795 = vrot.slane %v512, 1
      %v796 = vsel %vm781, %v794, %v795
      %v797 = vrot.slane %v497, 1
      %v798 = vrot.slane %v513, 1
      %v799 = vsel %vm781, %v797, %v798
      %v800 = vrot.slane %v498, 1
      %v801 = vrot.slane %v514, 1
      %v802 = vsel %vm781, %v800, %v801
      %v803 = vrot.slane %v499, 1
      %v804 = vrot.slane %v515, 1
      %v805 = vsel %vm781, %v803, %v804
      %v806 = vrot.slane %v500, 1
      %v807 = vrot.slane %v516, 1
      %v808 = vsel %vm781, %v806, %v807
      %v809 = vrot.slane %v501, 1
      %v810 = vrot.slane %v517, 1
      %v811 = vsel %vm781, %v809, %v810
      %v812 = vrot.slane %v502, 1
      %v813 = vrot.slane %v518, 1
      %v814 = vsel %vm781, %v812, %v813
      %v815 = vrot.slane %v503, 1
      %v816 = vrot.slane %v519, 1
      %v817 = vsel %vm781, %v815, %v816
      %v818 = vrot.slane %v504, 1
      %v819 = vrot.slane %v520, 1
      %v820 = vsel %vm781, %v818, %v819
      %v821 = vrot.slane %v505, 1
      %v822 = vrot.slane %v521, 1
      %v823 = vsel %vm781, %v821, %v822
      %v824 = vrot.slane %v506, 1
      %v825 = vrot.slane %v522, 1
      %v826 = vsel %vm781, %v824, %v825
      %v827 = vrot.slane %v507, 1
      %v828 = vrot.slane %v523, 1
      %v829 = vsel %vm781, %v827, %v828
      %830 = vrot.lane.b32.xlu0 %v784, 8
      %v831 = vpop.permute.xlu0 %830
      %832 = vrot.lane.b32.xlu0 %v787, 8
      %v833 = vpop.permute.xlu0 %832
      %834 = vrot.lane.b32.xlu0 %v790, 8
      %v835 = vpop.permute.xlu0 %834
      %836 = vrot.lane.b32.xlu0 %v793, 8
      %v837 = vpop.permute.xlu0 %836
      %838 = vrot.lane.b32.xlu0 %v796, 8
      %v839 = vpop.permute.xlu0 %838
      %840 = vrot.lane.b32.xlu0 %v799, 8
      %v841 = vpop.permute.xlu0 %840
      %842 = vrot.lane.b32.xlu0 %v802, 8
      %v843 = vpop.permute.xlu0 %842
      %844 = vrot.lane.b32.xlu0 %v805, 8
      %v845 = vpop.permute.xlu0 %844
      %846 = vrot.lane.b32.xlu0 %v808, 8
      %v847 = vpop.permute.xlu0 %846
      %848 = vrot.lane.b32.xlu0 %v811, 8
      %v849 = vpop.permute.xlu0 %848
      %850 = vrot.lane.b32.xlu0 %v814, 8
      %v851 = vpop.permute.xlu0 %850
      %852 = vrot.lane.b32.xlu0 %v817, 8
      %v853 = vpop.permute.xlu0 %852
      %854 = vrot.lane.b32.xlu0 %v820, 8
      %v855 = vpop.permute.xlu0 %854
      %856 = vrot.lane.b32.xlu0 %v823, 8
      %v857 = vpop.permute.xlu0 %856
      %858 = vrot.lane.b32.xlu0 %v826, 8
      %v859 = vpop.permute.xlu0 %858
      %860 = vrot.lane.b32.xlu0 %v829, 8
      %v861 = vpop.permute.xlu0 %860
      %vm862 = vcmask 31744
      %v864 = vsel %vm862, %v492, %v718
      %v866 = vsel %vm862, %v493, %v720
      %v868 = vsel %vm862, %v494, %v722
      %v870 = vsel %vm862, %v495, %v724
      %v872 = vsel %vm862, %v496, %v726
      %v874 = vsel %vm862, %v497, %v728
      %v876 = vsel %vm862, %v498, %v730
      %v878 = vsel %vm862, %v499, %v732
      %v880 = vsel %vm862, %v500, %v734
      %v882 = vsel %vm862, %v501, %v736
      %v884 = vsel %vm862, %v502, %v738
      %v886 = vsel %vm862, %v503, %v740
      %v888 = vsel %vm862, %v504, %v742
      %v890 = vsel %vm862, %v505, %v744
      %v892 = vsel %vm862, %v506, %v746
      %v894 = vsel %vm862, %v507, %v748
      %vm895 = vcmask 64512
      %v897 = vsel %vm895, %v864, %v831
      %v899 = vsel %vm895, %v866, %v833
      %v901 = vsel %vm895, %v868, %v835
      %v903 = vsel %vm895, %v870, %v837
      %v905 = vsel %vm895, %v872, %v839
      %v907 = vsel %vm895, %v874, %v841
      %v909 = vsel %vm895, %v876, %v843
      %v911 = vsel %vm895, %v878, %v845
      %v913 = vsel %vm895, %v880, %v847
      %v915 = vsel %vm895, %v882, %v849
      %v917 = vsel %vm895, %v884, %v851
      %v919 = vsel %vm895, %v886, %v853
      %v921 = vsel %vm895, %v888, %v855
      %v923 = vsel %vm895, %v890, %v857
      %v925 = vsel %vm895, %v892, %v859
      %v927 = vsel %vm895, %v894, %v861
      %944 = vrot.lane.b32.xlu0 %v897, 12
      %v945 = vpop.permute.xlu0 %944
      %946 = vrot.lane.b32.xlu0 %v899, 12
      %v947 = vpop.permute.xlu0 %946
      %948 = vrot.lane.b32.xlu0 %v901, 12
      %v949 = vpop.permute.xlu0 %948
      %950 = vrot.lane.b32.xlu0 %v903, 12
      %v951 = vpop.permute.xlu0 %950
      %952 = vrot.lane.b32.xlu0 %v905, 12
      %v953 = vpop.permute.xlu0 %952
      %954 = vrot.lane.b32.xlu0 %v907, 12
      %v955 = vpop.permute.xlu0 %954
      %956 = vrot.lane.b32.xlu0 %v909, 12
      %v957 = vpop.permute.xlu0 %956
      %958 = vrot.lane.b32.xlu0 %v911, 12
      %v959 = vpop.permute.xlu0 %958
      %960 = vrot.lane.b32.xlu0 %v913, 12
      %v961 = vpop.permute.xlu0 %960
      %962 = vrot.lane.b32.xlu0 %v915, 12
      %v963 = vpop.permute.xlu0 %962
      %964 = vrot.lane.b32.xlu0 %v917, 12
      %v965 = vpop.permute.xlu0 %964
      %966 = vrot.lane.b32.xlu0 %v919, 12
      %v967 = vpop.permute.xlu0 %966
      %968 = vrot.lane.b32.xlu0 %v921, 12
      %v969 = vpop.permute.xlu0 %968
      %970 = vrot.lane.b32.xlu0 %v923, 12
      %v971 = vpop.permute.xlu0 %970
      %972 = vrot.lane.b32.xlu0 %v925, 12
      %v973 = vpop.permute.xlu0 %972
      %974 = vrot.lane.b32.xlu0 %v927, 12
      %v975 = vpop.permute.xlu0 %974
      %977 = vrot.lane.b32.xlu0 %v899, 24
      %v978 = vpop.permute.xlu0 %977
      %979 = vrot.lane.b32.xlu0 %v901, 24
      %v980 = vpop.permute.xlu0 %979
      %981 = vrot.lane.b32.xlu0 %v903, 24
      %v982 = vpop.permute.xlu0 %981
      %983 = vrot.lane.b32.xlu0 %v905, 24
      %v984 = vpop.permute.xlu0 %983
      %985 = vrot.lane.b32.xlu0 %v907, 24
      %v986 = vpop.permute.xlu0 %985
      %987 = vrot.lane.b32.xlu0 %v909, 24
      %v988 = vpop.permute.xlu0 %987
      %989 = vrot.lane.b32.xlu0 %v911, 24
      %v990 = vpop.permute.xlu0 %989
      %991 = vrot.lane.b32.xlu0 %v913, 24
      %v992 = vpop.permute.xlu0 %991
      %993 = vrot.lane.b32.xlu0 %v915, 24
      %v994 = vpop.permute.xlu0 %993
      %995 = vrot.lane.b32.xlu0 %v917, 24
      %v996 = vpop.permute.xlu0 %995
      %997 = vrot.lane.b32.xlu0 %v919, 24
      %v998 = vpop.permute.xlu0 %997
      %999 = vrot.lane.b32.xlu0 %v921, 24
      %v1000 = vpop.permute.xlu0 %999
      %1001 = vrot.lane.b32.xlu0 %v923, 24
      %v1002 = vpop.permute.xlu0 %1001
      %1003 = vrot.lane.b32.xlu0 %v925, 24
      %v1004 = vpop.permute.xlu0 %1003
      %1005 = vrot.lane.b32.xlu0 %v927, 24
      %v1006 = vpop.permute.xlu0 %1005
      %1007 = vrot.lane.b32.xlu0 0, 24
      %v1008 = vpop.permute.xlu0 %1007
      %vm1009 = vcmask 97280
      %v1012 = vsel %vm1009, 0, %v945
      %v1014 = vsel %vm1009, %v897, %v947
      %v1016 = vsel %vm1009, %v899, %v949
      %v1018 = vsel %vm1009, %v901, %v951
      %v1020 = vsel %vm1009, %v903, %v953
      %v1022 = vsel %vm1009, %v905, %v955
      %v1024 = vsel %vm1009, %v907, %v957
      %v1026 = vsel %vm1009, %v909, %v959
      %v1028 = vsel %vm1009, %v911, %v961
      %v1030 = vsel %vm1009, %v913, %v963
      %v1032 = vsel %vm1009, %v915, %v965
      %v1034 = vsel %vm1009, %v917, %v967
      %v1036 = vsel %vm1009, %v919, %v969
      %v1038 = vsel %vm1009, %v921, %v971
      %v1040 = vsel %vm1009, %v923, %v973
      %v1042 = vsel %vm1009, %v925, %v975
      %vm1043 = vcmask 195584
      %v1045 = vsel %vm1043, %v1012, %v978
      %v1047 = vsel %vm1043, %v1014, %v980
      %v1049 = vsel %vm1043, %v1016, %v982
      %v1051 = vsel %vm1043, %v1018, %v984
      %v1053 = vsel %vm1043, %v1020, %v986
      %v1055 = vsel %vm1043, %v1022, %v988
      %v1057 = vsel %vm1043, %v1024, %v990
      %v1059 = vsel %vm1043, %v1026, %v992
      %v1061 = vsel %vm1043, %v1028, %v994
      %v1063 = vsel %vm1043, %v1030, %v996
      %v1065 = vsel %vm1043, %v1032, %v998
      %v1067 = vsel %vm1043, %v1034, %v1000
      %v1069 = vsel %vm1043, %v1036, %v1002
      %v1071 = vsel %vm1043, %v1038, %v1004
      %v1073 = vsel %vm1043, %v1040, %v1006
      %v1075 = vsel %vm1043, %v1042, %v1008
      %v1077 = vlaneseq
      %v1078 = vshrl.u32 %v1077, 7
      %v1079 = vsub.s32 0, %v1078
      %v1080 = vrot.slane %v226, %v1079
      %v1087 = vunpack.c.l.b16 %v260
      %v1088 = vunpack.c.l.b16 %v261
      %v1089 = vunpack.c.l.b16 %v262
      %v1090 = vunpack.c.l.b16 %v263
      %v1091 = vunpack.c.l.b16 %v264
      %v1092 = vpack.c.b16 %v1088, %v1087
      %v1093 = vpack.c.b16 %v1090, %v1089
      %v1094 = vpack.c.b16 %v1091, %v1091
      %vm1097 = vcmask 293888
      %v1098 = vsel %vm1097, %v1045, 0
      %v1100 = vsel %vm1097, %v1047, 0
      %v1102 = vsel %vm1097, %v1049, 0
      %v1104 = vsel %vm1097, %v1051, 0
      %v1106 = vsel %vm1097, %v1053, 0
      %v1108 = vsel %vm1097, %v1055, 0
      %v1110 = vsel %vm1097, %v1057, 0
      %v1112 = vsel %vm1097, %v1059, 0
      %v1114 = vsel %vm1097, %v1061, 0
      %v1116 = vsel %vm1097, %v1063, 0
      %v1118 = vsel %vm1097, %v1065, 0
      %v1120 = vsel %vm1097, %v1067, 0
      %v1122 = vsel %vm1097, %v1069, 0
      %v1124 = vsel %vm1097, %v1071, 0
      %v1126 = vsel %vm1097, %v1073, 0
      %v1128 = vsel %vm1097, %v1075, 0
      %vm1130 = vcmask 1041408
      %v1132 = vsel %vm1130, %v1094, 0
      %1134 = vmatprep.subr.bf16.mxu0 0
      %1135 = vmatpush1.bf16.msra.mxu0 %v1092
      %1136 = vmatprep.subr.bf16.mxu0 0
      %1137 = vmatpush1.bf16.msra.mxu0 %v1093
      %1138 = vmatprep.subr.bf16.mxu0 0
      %1139 = vmatpush1.bf16.msra.mxu0 %v1132
      %1140 = vmatprep.subr.bf16.mxu0 0
      %1141 = vmatpush1.bf16.msra.mxu0 0
      %1142 = vmatprep.subr.bf16.mxu0 0
      %1143 = vmatpush1.bf16.msra.mxu0 0
      %1144 = vmatprep.subr.bf16.mxu0 0
      %1145 = vmatpush1.bf16.msra.mxu0 0
      %1146 = vmatprep.subr.bf16.mxu0 0
      %1147 = vmatpush1.bf16.msra.mxu0 0
      %1148 = vmatprep.subr.bf16.mxu0 0
      %1149 = vmatpush1.bf16.msra.mxu0 0
      %1150 = vmatprep.subr.bf16.mxu0 0
      %1151 = vmatpush1.bf16.msra.mxu0 0
      %1152 = vmatprep.subr.bf16.mxu0 0
      %1153 = vmatpush1.bf16.msra.mxu0 0
      %1154 = vmatprep.subr.bf16.mxu0 0
      %1155 = vmatpush1.bf16.msra.mxu0 0
      %1156 = vmatprep.subr.bf16.mxu0 0
      %1157 = vmatpush1.bf16.msra.mxu0 0
      %1158 = vmatprep.subr.bf16.mxu0 0
      %1159 = vmatpush1.bf16.msra.mxu0 0
      %1160 = vmatprep.subr.bf16.mxu0 0
      %1161 = vmatpush1.bf16.msra.mxu0 0
      %1162 = vmatprep.subr.bf16.mxu0 0
      %1163 = vmatpush1.bf16.msra.mxu0 0
      %1164 = vmatprep.subr.bf16.mxu0 0
      %1165 = vmatpush1.bf16.msra.mxu0 0
      %1166 = vmatprep.mubr.bf16.mxu0 0
      %1167 = vmatmul.mubr.bf16.gmra.mrb[0].mxu0 %v1098
      %v1168 = vpop.f32.mrb[0].mxu0
      %v1169 = vadd.f32 %v1080, %v1168
      %v1170 = vpop.f32.mrb[0].mxu0
      %v1171 = vpop.f32.mrb[0].mxu0
      %v1172 = vadd.f32 %v1080, %v1171
      %v1173 = vpop.f32.mrb[0].mxu0
      %1174 = vmatprep.mubr.bf16.mxu0 0
      %1175 = vmatmul.mubr.bf16.gmra.mrb[0].mxu0 %v1100
      %v1176 = vpop.f32.mrb[0].mxu0
      %v1177 = vadd.f32 %v1080, %v1176
      %v1178 = vpop.f32.mrb[0].mxu0
      %v1179 = vpop.f32.mrb[0].mxu0
      %v1180 = vadd.f32 %v1080, %v1179
      %v1181 = vpop.f32.mrb[0].mxu0
      %1182 = vmatprep.mubr.bf16.mxu0 0
      %1183 = vmatmul.mubr.bf16.gmra.mrb[0].mxu0 %v1102
      %v1184 = vpop.f32.mrb[0].mxu0
      %v1185 = vadd.f32 %v1080, %v1184
      %v1186 = vpop.f32.mrb[0].mxu0
      %v1187 = vpop.f32.mrb[0].mxu0
      %v1188 = vadd.f32 %v1080, %v1187
      %v1189 = vpop.f32.mrb[0].mxu0
      %1190 = vmatprep.mubr.bf16.mxu0 0
      %1191 = vmatmul.mubr.bf16.gmra.mrb[0].mxu0 %v1104
      %v1192 = vpop.f32.mrb[0].mxu0
      %v1193 = vadd.f32 %v1080, %v1192
      %v1194 = vpop.f32.mrb[0].mxu0
      %v1195 = vpop.f32.mrb[0].mxu0
      %v1196 = vadd.f32 %v1080, %v1195
      %v1197 = vpop.f32.mrb[0].mxu0
      %1198 = vmatprep.mubr.bf16.mxu0 0
      %1199 = vmatmul.mubr.bf16.gmra.mrb[0].mxu0 %v1106
      %v1200 = vpop.f32.mrb[0].mxu0
      %v1201 = vadd.f32 %v1080, %v1200
      %v1202 = vpop.f32.mrb[0].mxu0
      %v1203 = vpop.f32.mrb[0].mxu0
      %v1204 = vadd.f32 %v1080, %v1203
      %v1205 = vpop.f32.mrb[0].mxu0
      %1206 = vmatprep.mubr.bf16.mxu0 0
      %1207 = vmatmul.mubr.bf16.gmra.mrb[0].mxu0 %v1108
      %v1208 = vpop.f32.mrb[0].mxu0
      %v1209 = vadd.f32 %v1080, %v1208
      %v1210 = vpop.f32.mrb[0].mxu0
      %v1211 = vpop.f32.mrb[0].mxu0
      %v1212 = vadd.f32 %v1080, %v1211
      %v1213 = vpop.f32.mrb[0].mxu0
      %1214 = vmatprep.mubr.bf16.mxu0 0
      %1215 = vmatmul.mubr.bf16.gmra.mrb[0].mxu0 %v1110
      %v1216 = vpop.f32.mrb[0].mxu0
      %v1217 = vadd.f32 %v1080, %v1216
      %v1218 = vpop.f32.mrb[0].mxu0
      %v1219 = vpop.f32.mrb[0].mxu0
      %v1220 = vadd.f32 %v1080, %v1219
      %v1221 = vpop.f32.mrb[0].mxu0
      %1222 = vmatprep.mubr.bf16.mxu0 0
      %1223 = vmatmul.mubr.bf16.gmra.mrb[0].mxu0 %v1112
      %v1224 = vpop.f32.mrb[0].mxu0
      %v1225 = vadd.f32 %v1080, %v1224
      %v1226 = vpop.f32.mrb[0].mxu0
      %v1227 = vpop.f32.mrb[0].mxu0
      %v1228 = vadd.f32 %v1080, %v1227
      %v1229 = vpop.f32.mrb[0].mxu0
      %1230 = vmatprep.mubr.bf16.mxu0 0
      %1231 = vmatmul.mubr.bf16.gmra.mrb[0].mxu0 %v1114
      %v1232 = vpop.f32.mrb[0].mxu0
      %v1233 = vadd.f32 %v1080, %v1232
      %v1234 = vpop.f32.mrb[0].mxu0
      %v1235 = vpop.f32.mrb[0].mxu0
      %v1236 = vadd.f32 %v1080, %v1235
      %v1237 = vpop.f32.mrb[0].mxu0
      %1238 = vmatprep.mubr.bf16.mxu0 0
      %1239 = vmatmul.mubr.bf16.gmra.mrb[0].mxu0 %v1116
      %v1240 = vpop.f32.mrb[0].mxu0
      %v1241 = vadd.f32 %v1080, %v1240
      %v1242 = vpop.f32.mrb[0].mxu0
      %v1243 = vpop.f32.mrb[0].mxu0
      %v1244 = vadd.f32 %v1080, %v1243
      %v1245 = vpop.f32.mrb[0].mxu0
      %1246 = vmatprep.mubr.bf16.mxu0 0
      %1247 = vmatmul.mubr.bf16.gmra.mrb[0].mxu0 %v1118
      %v1248 = vpop.f32.mrb[0].mxu0
      %v1249 = vadd.f32 %v1080, %v1248
      %v1250 = vpop.f32.mrb[0].mxu0
      %v1251 = vpop.f32.mrb[0].mxu0
      %v1252 = vadd.f32 %v1080, %v1251
      %v1253 = vpop.f32.mrb[0].mxu0
      %1254 = vmatprep.mubr.bf16.mxu0 0
      %1255 = vmatmul.mubr.bf16.gmra.mrb[0].mxu0 %v1120
      %v1256 = vpop.f32.mrb[0].mxu0
      %v1257 = vadd.f32 %v1080, %v1256
      %v1258 = vpop.f32.mrb[0].mxu0
      %v1259 = vpop.f32.mrb[0].mxu0
      %v1260 = vadd.f32 %v1080, %v1259
      %v1261 = vpop.f32.mrb[0].mxu0
      %1262 = vmatprep.mubr.bf16.mxu0 0
      %1263 = vmatmul.mubr.bf16.gmra.mrb[0].mxu0 %v1122
      %v1264 = vpop.f32.mrb[0].mxu0
      %v1265 = vadd.f32 %v1080, %v1264
      %v1266 = vpop.f32.mrb[0].mxu0
      %v1267 = vpop.f32.mrb[0].mxu0
      %v1268 = vadd.f32 %v1080, %v1267
      %v1269 = vpop.f32.mrb[0].mxu0
      %1270 = vmatprep.mubr.bf16.mxu0 0
      %1271 = vmatmul.mubr.bf16.gmra.mrb[0].mxu0 %v1124
      %v1272 = vpop.f32.mrb[0].mxu0
      %v1273 = vadd.f32 %v1080, %v1272
      %v1274 = vpop.f32.mrb[0].mxu0
      %v1275 = vpop.f32.mrb[0].mxu0
      %v1276 = vadd.f32 %v1080, %v1275
      %v1277 = vpop.f32.mrb[0].mxu0
      %1278 = vmatprep.mubr.bf16.mxu0 0
      %1279 = vmatmul.mubr.bf16.gmra.mrb[0].mxu0 %v1126
      %v1280 = vpop.f32.mrb[0].mxu0
      %v1281 = vadd.f32 %v1080, %v1280
      %v1282 = vpop.f32.mrb[0].mxu0
      %v1283 = vpop.f32.mrb[0].mxu0
      %v1284 = vadd.f32 %v1080, %v1283
      %v1285 = vpop.f32.mrb[0].mxu0
      %1286 = vmatprep.mubr.bf16.mxu0 0
      %1287 = vmatmul.mubr.bf16.gmra.mrb[0].mxu0 %v1128
      %v1288 = vpop.f32.mrb[0].mxu0
      %v1289 = vadd.f32 %v1080, %v1288
      %v1290 = vpop.f32.mrb[0].mxu0
      %v1291 = vpop.f32.mrb[0].mxu0
      %v1292 = vadd.f32 %v1080, %v1291
      %v1293 = vpop.f32.mrb[0].mxu0
      %1294 = vdwg.mxu0
      %v1295 = vmax.f32 %v1169, 0.0
      %v1296 = vmax.f32 %v1172, 0.0
      %v1297 = vmax.f32 %v1177, 0.0
      %v1298 = vmax.f32 %v1180, 0.0
      %v1299 = vmax.f32 %v1185, 0.0
      %v1300 = vmax.f32 %v1188, 0.0
      %v1301 = vmax.f32 %v1193, 0.0
      %v1302 = vmax.f32 %v1196, 0.0
      %v1303 = vmax.f32 %v1201, 0.0
      %v1304 = vmax.f32 %v1204, 0.0
      %v1305 = vmax.f32 %v1209, 0.0
      %v1306 = vmax.f32 %v1212, 0.0
      %v1307 = vmax.f32 %v1217, 0.0
      %v1308 = vmax.f32 %v1220, 0.0
      %v1309 = vmax.f32 %v1225, 0.0
      %v1310 = vmax.f32 %v1228, 0.0
      %v1311 = vmax.f32 %v1233, 0.0
      %v1312 = vmax.f32 %v1236, 0.0
      %v1313 = vmax.f32 %v1241, 0.0
      %v1314 = vmax.f32 %v1244, 0.0
      %v1315 = vmax.f32 %v1249, 0.0
      %v1316 = vmax.f32 %v1252, 0.0
      %v1317 = vmax.f32 %v1257, 0.0
      %v1318 = vmax.f32 %v1260, 0.0
      %v1319 = vmax.f32 %v1265, 0.0
      %v1320 = vmax.f32 %v1268, 0.0
      %v1321 = vmax.f32 %v1273, 0.0
      %v1322 = vmax.f32 %v1276, 0.0
      %v1323 = vmax.f32 %v1281, 0.0
      %v1324 = vmax.f32 %v1284, 0.0
      %v1325 = vmax.f32 %v1289, 0.0
      %v1326 = vmax.f32 %v1292, 0.0
      %v1327 = vpack.c.bf16 %v1296, %v1295
      %v1328 = vpack.c.bf16 %v1298, %v1297
      %v1329 = vpack.c.bf16 %v1300, %v1299
      %v1330 = vpack.c.bf16 %v1302, %v1301
      %v1331 = vpack.c.bf16 %v1304, %v1303
      %v1332 = vpack.c.bf16 %v1306, %v1305
      %v1333 = vpack.c.bf16 %v1308, %v1307
      %v1334 = vpack.c.bf16 %v1310, %v1309
      %v1335 = vpack.c.bf16 %v1312, %v1311
      %v1336 = vpack.c.bf16 %v1314, %v1313
      %v1337 = vpack.c.bf16 %v1316, %v1315
      %v1338 = vpack.c.bf16 %v1318, %v1317
      %v1339 = vpack.c.bf16 %v1320, %v1319
      %v1340 = vpack.c.bf16 %v1322, %v1321
      %v1341 = vpack.c.bf16 %v1324, %v1323
      %v1342 = vpack.c.bf16 %v1326, %v1325
      %v1343 = vld [vmem:[%s3] sm:$0xf]
      %v1344 = vld [vmem:[%s3 + $0x4] sm:$0xf]
      %v1345 = vld [vmem:[%s3 + $0x8] sm:$0xf]
      %v1346 = vld [vmem:[%s3 + $0xc] sm:$0xf]
      %v1347 = vld [vmem:[%s3 + $0x10] sm:$0xf]
      %v1348 = vld [vmem:[%s3 + $0x14] sm:$0xf]
      %v1349 = vld [vmem:[%s3 + $0x18] sm:$0xf]
      %v1350 = vld [vmem:[%s3 + $0x1c] sm:$0xf]
      %v1351 = vld [vmem:[%s3 + $0x20] sm:$0xf]
      %v1353 = vshrl.u32 %v1327, 16
      %v1355 = vrot.slane %v1353, 7
      %v1356 = vshll.u32 %v1327, 16
      %v1358 = vor.u32 %v1355, %v1356
      %v1360 = vshrl.u32 %v1328, 16
      %v1362 = vrot.slane %v1360, 7
      %v1363 = vshll.u32 %v1328, 16
      %v1365 = vor.u32 %v1362, %v1363
      %v1367 = vshrl.u32 %v1329, 16
      %v1369 = vrot.slane %v1367, 7
      %v1370 = vshll.u32 %v1329, 16
      %v1372 = vor.u32 %v1369, %v1370
      %v1374 = vshrl.u32 %v1330, 16
      %v1376 = vrot.slane %v1374, 7
      %v1377 = vshll.u32 %v1330, 16
      %v1379 = vor.u32 %v1376, %v1377
      %v1381 = vshrl.u32 %v1331, 16
      %v1383 = vrot.slane %v1381, 7
      %v1384 = vshll.u32 %v1331, 16
      %v1386 = vor.u32 %v1383, %v1384
      %v1388 = vshrl.u32 %v1332, 16
      %v1390 = vrot.slane %v1388, 7
      %v1391 = vshll.u32 %v1332, 16
      %v1393 = vor.u32 %v1390, %v1391
      %v1395 = vshrl.u32 %v1333, 16
      %v1397 = vrot.slane %v1395, 7
      %v1398 = vshll.u32 %v1333, 16
      %v1400 = vor.u32 %v1397, %v1398
      %v1402 = vshrl.u32 %v1334, 16
      %v1404 = vrot.slane %v1402, 7
      %v1405 = vshll.u32 %v1334, 16
      %v1407 = vor.u32 %v1404, %v1405
      %v1409 = vshrl.u32 %v1335, 16
      %v1411 = vrot.slane %v1409, 7
      %v1412 = vshll.u32 %v1335, 16
      %v1414 = vor.u32 %v1411, %v1412
      %v1416 = vshrl.u32 %v1336, 16
      %v1418 = vrot.slane %v1416, 7
      %v1419 = vshll.u32 %v1336, 16
      %v1421 = vor.u32 %v1418, %v1419
      %v1423 = vshrl.u32 %v1337, 16
      %v1425 = vrot.slane %v1423, 7
      %v1426 = vshll.u32 %v1337, 16
      %v1428 = vor.u32 %v1425, %v1426
      %v1430 = vshrl.u32 %v1338, 16
      %v1432 = vrot.slane %v1430, 7
      %v1433 = vshll.u32 %v1338, 16
      %v1435 = vor.u32 %v1432, %v1433
      %v1437 = vshrl.u32 %v1339, 16
      %v1439 = vrot.slane %v1437, 7
      %v1440 = vshll.u32 %v1339, 16
      %v1442 = vor.u32 %v1439, %v1440
      %v1444 = vshrl.u32 %v1340, 16
      %v1446 = vrot.slane %v1444, 7
      %v1447 = vshll.u32 %v1340, 16
      %v1449 = vor.u32 %v1446, %v1447
      %v1451 = vshrl.u32 %v1341, 16
      %v1453 = vrot.slane %v1451, 7
      %v1454 = vshll.u32 %v1341, 16
      %v1456 = vor.u32 %v1453, %v1454
      %v1458 = vshrl.u32 %v1342, 16
      %v1460 = vrot.slane %v1458, 7
      %v1461 = vshll.u32 %v1342, 16
      %v1463 = vor.u32 %v1460, %v1461
      %v1496 = vsel %vm491, 0, %v1358
      %v1497 = vsel %vm491, 0, %v1365
      %v1498 = vsel %vm491, 0, %v1372
      %v1499 = vsel %vm491, 0, %v1379
      %v1500 = vsel %vm491, 0, %v1386
      %v1501 = vsel %vm491, 0, %v1393
      %v1502 = vsel %vm491, 0, %v1400
      %v1503 = vsel %vm491, 0, %v1407
      %v1504 = vsel %vm491, 0, %v1414
      %v1505 = vsel %vm491, 0, %v1421
      %v1506 = vsel %vm491, 0, %v1428
      %v1507 = vsel %vm491, 0, %v1435
      %v1508 = vsel %vm491, 0, %v1442
      %v1509 = vsel %vm491, 0, %v1449
      %v1510 = vsel %vm491, 0, %v1456
      %v1511 = vsel %vm491, 0, %v1463
      %v1512 = vsel %vm491, %v1355, 0
      %v1513 = vsel %vm491, %v1362, 0
      %v1514 = vsel %vm491, %v1369, 0
      %v1515 = vsel %vm491, %v1376, 0
      %v1516 = vsel %vm491, %v1383, 0
      %v1517 = vsel %vm491, %v1390, 0
      %v1518 = vsel %vm491, %v1397, 0
      %v1519 = vsel %vm491, %v1404, 0
      %v1520 = vsel %vm491, %v1411, 0
      %v1521 = vsel %vm491, %v1418, 0
      %v1522 = vsel %vm491, %v1425, 0
      %v1523 = vsel %vm491, %v1432, 0
      %v1524 = vsel %vm491, %v1439, 0
      %v1525 = vsel %vm491, %v1446, 0
      %v1526 = vsel %vm491, %v1453, 0
      %v1527 = vsel %vm491, %v1460, 0
      %v1529 = vshrl.u32 %v1496, 16
      %v1531 = vshll.u32 %v1496, 16
      %v1533 = vrot.slane %v1531, 1
      %v1534 = vor.u32 %v1529, %v1533
      %v1536 = vshll.u32 %v1512, 16
      %v1538 = vrot.slane %v1536, 1
      %v1539 = vsel %vm524, %v1534, %v1538
      %v1541 = vshrl.u32 %v1497, 16
      %v1543 = vshll.u32 %v1497, 16
      %v1545 = vrot.slane %v1543, 1
      %v1546 = vor.u32 %v1541, %v1545
      %v1548 = vshll.u32 %v1513, 16
      %v1550 = vrot.slane %v1548, 1
      %v1551 = vsel %vm524, %v1546, %v1550
      %v1553 = vshrl.u32 %v1498, 16
      %v1555 = vshll.u32 %v1498, 16
      %v1557 = vrot.slane %v1555, 1
      %v1558 = vor.u32 %v1553, %v1557
      %v1560 = vshll.u32 %v1514, 16
      %v1562 = vrot.slane %v1560, 1
      %v1563 = vsel %vm524, %v1558, %v1562
      %v1565 = vshrl.u32 %v1499, 16
      %v1567 = vshll.u32 %v1499, 16
      %v1569 = vrot.slane %v1567, 1
      %v1570 = vor.u32 %v1565, %v1569
      %v1572 = vshll.u32 %v1515, 16
      %v1574 = vrot.slane %v1572, 1
      %v1575 = vsel %vm524, %v1570, %v1574
      %v1577 = vshrl.u32 %v1500, 16
      %v1579 = vshll.u32 %v1500, 16
      %v1581 = vrot.slane %v1579, 1
      %v1582 = vor.u32 %v1577, %v1581
      %v1584 = vshll.u32 %v1516, 16
      %v1586 = vrot.slane %v1584, 1
      %v1587 = vsel %vm524, %v1582, %v1586
      %v1589 = vshrl.u32 %v1501, 16
      %v1591 = vshll.u32 %v1501, 16
      %v1593 = vrot.slane %v1591, 1
      %v1594 = vor.u32 %v1589, %v1593
      %v1596 = vshll.u32 %v1517, 16
      %v1598 = vrot.slane %v1596, 1
      %v1599 = vsel %vm524, %v1594, %v1598
      %v1601 = vshrl.u32 %v1502, 16
      %v1603 = vshll.u32 %v1502, 16
      %v1605 = vrot.slane %v1603, 1
      %v1606 = vor.u32 %v1601, %v1605
      %v1608 = vshll.u32 %v1518, 16
      %v1610 = vrot.slane %v1608, 1
      %v1611 = vsel %vm524, %v1606, %v1610
      %v1613 = vshrl.u32 %v1503, 16
      %v1615 = vshll.u32 %v1503, 16
      %v1617 = vrot.slane %v1615, 1
      %v1618 = vor.u32 %v1613, %v1617
      %v1620 = vshll.u32 %v1519, 16
      %v1622 = vrot.slane %v1620, 1
      %v1623 = vsel %vm524, %v1618, %v1622
      %v1625 = vshrl.u32 %v1504, 16
      %v1627 = vshll.u32 %v1504, 16
      %v1629 = vrot.slane %v1627, 1
      %v1630 = vor.u32 %v1625, %v1629
      %v1632 = vshll.u32 %v1520, 16
      %v1634 = vrot.slane %v1632, 1
      %v1635 = vsel %vm524, %v1630, %v1634
      %v1637 = vshrl.u32 %v1505, 16
      %v1639 = vshll.u32 %v1505, 16
      %v1641 = vrot.slane %v1639, 1
      %v1642 = vor.u32 %v1637, %v1641
      %v1644 = vshll.u32 %v1521, 16
      %v1646 = vrot.slane %v1644, 1
      %v1647 = vsel %vm524, %v1642, %v1646
      %v1649 = vshrl.u32 %v1506, 16
      %v1651 = vshll.u32 %v1506, 16
      %v1653 = vrot.slane %v1651, 1
      %v1654 = vor.u32 %v1649, %v1653
      %v1656 = vshll.u32 %v1522, 16
      %v1658 = vrot.slane %v1656, 1
      %v1659 = vsel %vm524, %v1654, %v1658
      %v1661 = vshrl.u32 %v1507, 16
      %v1663 = vshll.u32 %v1507, 16
      %v1665 = vrot.slane %v1663, 1
      %v1666 = vor.u32 %v1661, %v1665
      %v1668 = vshll.u32 %v1523, 16
      %v1670 = vrot.slane %v1668, 1
      %v1671 = vsel %vm524, %v1666, %v1670
      %v1673 = vshrl.u32 %v1508, 16
      %v1675 = vshll.u32 %v1508, 16
      %v1677 = vrot.slane %v1675, 1
      %v1678 = vor.u32 %v1673, %v1677
      %v1680 = vshll.u32 %v1524, 16
      %v1682 = vrot.slane %v1680, 1
      %v1683 = vsel %vm524, %v1678, %v1682
      %v1685 = vshrl.u32 %v1509, 16
      %v1687 = vshll.u32 %v1509, 16
      %v1689 = vrot.slane %v1687, 1
      %v1690 = vor.u32 %v1685, %v1689
      %v1692 = vshll.u32 %v1525, 16
      %v1694 = vrot.slane %v1692, 1
      %v1695 = vsel %vm524, %v1690, %v1694
      %v1697 = vshrl.u32 %v1510, 16
      %v1699 = vshll.u32 %v1510, 16
      %v1701 = vrot.slane %v1699, 1
      %v1702 = vor.u32 %v1697, %v1701
      %v1704 = vshll.u32 %v1526, 16
      %v1706 = vrot.slane %v1704, 1
      %v1707 = vsel %vm524, %v1702, %v1706
      %v1709 = vshrl.u32 %v1511, 16
      %v1711 = vshll.u32 %v1511, 16
      %v1713 = vrot.slane %v1711, 1
      %v1714 = vor.u32 %v1709, %v1713
      %v1716 = vshll.u32 %v1527, 16
      %v1718 = vrot.slane %v1716, 1
      %v1719 = vsel %vm524, %v1714, %v1718
      %1720 = vrot.lane.b32.xlu0 %v1539, 8
      %v1721 = vpop.permute.xlu0 %1720
      %1722 = vrot.lane.b32.xlu0 %v1551, 8
      %v1723 = vpop.permute.xlu0 %1722
      %1724 = vrot.lane.b32.xlu0 %v1563, 8
      %v1725 = vpop.permute.xlu0 %1724
      %1726 = vrot.lane.b32.xlu0 %v1575, 8
      %v1727 = vpop.permute.xlu0 %1726
      %1728 = vrot.lane.b32.xlu0 %v1587, 8
      %v1729 = vpop.permute.xlu0 %1728
      %1730 = vrot.lane.b32.xlu0 %v1599, 8
      %v1731 = vpop.permute.xlu0 %1730
      %1732 = vrot.lane.b32.xlu0 %v1611, 8
      %v1733 = vpop.permute.xlu0 %1732
      %1734 = vrot.lane.b32.xlu0 %v1623, 8
      %v1735 = vpop.permute.xlu0 %1734
      %1736 = vrot.lane.b32.xlu0 %v1635, 8
      %v1737 = vpop.permute.xlu0 %1736
      %1738 = vrot.lane.b32.xlu0 %v1647, 8
      %v1739 = vpop.permute.xlu0 %1738
      %1740 = vrot.lane.b32.xlu0 %v1659, 8
      %v1741 = vpop.permute.xlu0 %1740
      %1742 = vrot.lane.b32.xlu0 %v1671, 8
      %v1743 = vpop.permute.xlu0 %1742
      %1744 = vrot.lane.b32.xlu0 %v1683, 8
      %v1745 = vpop.permute.xlu0 %1744
      %1746 = vrot.lane.b32.xlu0 %v1695, 8
      %v1747 = vpop.permute.xlu0 %1746
      %1748 = vrot.lane.b32.xlu0 %v1707, 8
      %v1749 = vpop.permute.xlu0 %1748
      %1750 = vrot.lane.b32.xlu0 %v1719, 8
      %v1751 = vpop.permute.xlu0 %1750
      %v1784 = vrot.slane %v1496, 1
      %v1785 = vrot.slane %v1512, 1
      %v1786 = vsel %vm781, %v1784, %v1785
      %v1787 = vrot.slane %v1497, 1
      %v1788 = vrot.slane %v1513, 1
      %v1789 = vsel %vm781, %v1787, %v1788
      %v1790 = vrot.slane %v1498, 1
      %v1791 = vrot.slane %v1514, 1
      %v1792 = vsel %vm781, %v1790, %v1791
      %v1793 = vrot.slane %v1499, 1
      %v1794 = vrot.slane %v1515, 1
      %v1795 = vsel %vm781, %v1793, %v1794
      %v1796 = vrot.slane %v1500, 1
      %v1797 = vrot.slane %v1516, 1
      %v1798 = vsel %vm781, %v1796, %v1797
      %v1799 = vrot.slane %v1501, 1
      %v1800 = vrot.slane %v1517, 1
      %v1801 = vsel %vm781, %v1799, %v1800
      %v1802 = vrot.slane %v1502, 1
      %v1803 = vrot.slane %v1518, 1
      %v1804 = vsel %vm781, %v1802, %v1803
      %v1805 = vrot.slane %v1503, 1
      %v1806 = vrot.slane %v1519, 1
      %v1807 = vsel %vm781, %v1805, %v1806
      %v1808 = vrot.slane %v1504, 1
      %v1809 = vrot.slane %v1520, 1
      %v1810 = vsel %vm781, %v1808, %v1809
      %v1811 = vrot.slane %v1505, 1
      %v1812 = vrot.slane %v1521, 1
      %v1813 = vsel %vm781, %v1811, %v1812
      %v1814 = vrot.slane %v1506, 1
      %v1815 = vrot.slane %v1522, 1
      %v1816 = vsel %vm781, %v1814, %v1815
      %v1817 = vrot.slane %v1507, 1
      %v1818 = vrot.slane %v1523, 1
      %v1819 = vsel %vm781, %v1817, %v1818
      %v1820 = vrot.slane %v1508, 1
      %v1821 = vrot.slane %v1524, 1
      %v1822 = vsel %vm781, %v1820, %v1821
      %v1823 = vrot.slane %v1509, 1
      %v1824 = vrot.slane %v1525, 1
      %v1825 = vsel %vm781, %v1823, %v1824
      %v1826 = vrot.slane %v1510, 1
      %v1827 = vrot.slane %v1526, 1
      %v1828 = vsel %vm781, %v1826, %v1827
      %v1829 = vrot.slane %v1511, 1
      %v1830 = vrot.slane %v1527, 1
      %v1831 = vsel %vm781, %v1829, %v1830
      %1832 = vrot.lane.b32.xlu0 %v1786, 16
      %v1833 = vpop.permute.xlu0 %1832
      %1834 = vrot.lane.b32.xlu0 %v1789, 16
      %v1835 = vpop.permute.xlu0 %1834
      %1836 = vrot.lane.b32.xlu0 %v1792, 16
      %v1837 = vpop.permute.xlu0 %1836
      %1838 = vrot.lane.b32.xlu0 %v1795, 16
      %v1839 = vpop.permute.xlu0 %1838
      %1840 = vrot.lane.b32.xlu0 %v1798, 16
      %v1841 = vpop.permute.xlu0 %1840
      %1842 = vrot.lane.b32.xlu0 %v1801, 16
      %v1843 = vpop.permute.xlu0 %1842
      %1844 = vrot.lane.b32.xlu0 %v1804, 16
      %v1845 = vpop.permute.xlu0 %1844
      %1846 = vrot.lane.b32.xlu0 %v1807, 16
      %v1847 = vpop.permute.xlu0 %1846
      %1848 = vrot.lane.b32.xlu0 %v1810, 16
      %v1849 = vpop.permute.xlu0 %1848
      %1850 = vrot.lane.b32.xlu0 %v1813, 16
      %v1851 = vpop.permute.xlu0 %1850
      %1852 = vrot.lane.b32.xlu0 %v1816, 16
      %v1853 = vpop.permute.xlu0 %1852
      %1854 = vrot.lane.b32.xlu0 %v1819, 16
      %v1855 = vpop.permute.xlu0 %1854
      %1856 = vrot.lane.b32.xlu0 %v1822, 16
      %v1857 = vpop.permute.xlu0 %1856
      %1858 = vrot.lane.b32.xlu0 %v1825, 16
      %v1859 = vpop.permute.xlu0 %1858
      %1860 = vrot.lane.b32.xlu0 %v1828, 16
      %v1861 = vpop.permute.xlu0 %1860
      %1862 = vrot.lane.b32.xlu0 %v1831, 16
      %v1863 = vpop.permute.xlu0 %1862
      %v1865 = vsel %vm895, %v1496, %v1721
      %v1867 = vsel %vm895, %v1497, %v1723
      %v1869 = vsel %vm895, %v1498, %v1725
      %v1871 = vsel %vm895, %v1499, %v1727
      %v1873 = vsel %vm895, %v1500, %v1729
      %v1875 = vsel %vm895, %v1501, %v1731
      %v1877 = vsel %vm895, %v1502, %v1733
      %v1879 = vsel %vm895, %v1503, %v1735
      %v1881 = vsel %vm895, %v1504, %v1737
      %v1883 = vsel %vm895, %v1505, %v1739
      %v1885 = vsel %vm895, %v1506, %v1741
      %v1887 = vsel %vm895, %v1507, %v1743
      %v1889 = vsel %vm895, %v1508, %v1745
      %v1891 = vsel %vm895, %v1509, %v1747
      %v1893 = vsel %vm895, %v1510, %v1749
      %v1895 = vsel %vm895, %v1511, %v1751
      %vm1896 = vcmask 130048
      %v1898 = vsel %vm1896, %v1865, %v1833
      %v1900 = vsel %vm1896, %v1867, %v1835
      %v1902 = vsel %vm1896, %v1869, %v1837
      %v1904 = vsel %vm1896, %v1871, %v1839
      %v1906 = vsel %vm1896, %v1873, %v1841
      %v1908 = vsel %vm1896, %v1875, %v1843
      %v1910 = vsel %vm1896, %v1877, %v1845
      %v1912 = vsel %vm1896, %v1879, %v1847
      %v1914 = vsel %vm1896, %v1881, %v1849
      %v1916 = vsel %vm1896, %v1883, %v1851
      %v1918 = vsel %vm1896, %v1885, %v1853
      %v1920 = vsel %vm1896, %v1887, %v1855
      %v1922 = vsel %vm1896, %v1889, %v1857
      %v1924 = vsel %vm1896, %v1891, %v1859
      %v1926 = vsel %vm1896, %v1893, %v1861
      %v1928 = vsel %vm1896, %v1895, %v1863
      %1945 = vrot.lane.b32.xlu0 %v1898, 24
      %v1946 = vpop.permute.xlu0 %1945
      %1947 = vrot.lane.b32.xlu0 %v1900, 24
      %v1948 = vpop.permute.xlu0 %1947
      %1949 = vrot.lane.b32.xlu0 %v1902, 24
      %v1950 = vpop.permute.xlu0 %1949
      %1951 = vrot.lane.b32.xlu0 %v1904, 24
      %v1952 = vpop.permute.xlu0 %1951
      %1953 = vrot.lane.b32.xlu0 %v1906, 24
      %v1954 = vpop.permute.xlu0 %1953
      %1955 = vrot.lane.b32.xlu0 %v1908, 24
      %v1956 = vpop.permute.xlu0 %1955
      %1957 = vrot.lane.b32.xlu0 %v1910, 24
      %v1958 = vpop.permute.xlu0 %1957
      %1959 = vrot.lane.b32.xlu0 %v1912, 24
      %v1960 = vpop.permute.xlu0 %1959
      %1961 = vrot.lane.b32.xlu0 %v1914, 24
      %v1962 = vpop.permute.xlu0 %1961
      %1963 = vrot.lane.b32.xlu0 %v1916, 24
      %v1964 = vpop.permute.xlu0 %1963
      %1965 = vrot.lane.b32.xlu0 %v1918, 24
      %v1966 = vpop.permute.xlu0 %1965
      %1967 = vrot.lane.b32.xlu0 %v1920, 24
      %v1968 = vpop.permute.xlu0 %1967
      %1969 = vrot.lane.b32.xlu0 %v1922, 24
      %v1970 = vpop.permute.xlu0 %1969
      %1971 = vrot.lane.b32.xlu0 %v1924, 24
      %v1972 = vpop.permute.xlu0 %1971
      %1973 = vrot.lane.b32.xlu0 %v1926, 24
      %v1974 = vpop.permute.xlu0 %1973
      %1975 = vrot.lane.b32.xlu0 %v1928, 24
      %v1976 = vpop.permute.xlu0 %1975
      %1977 = vrot.lane.b32.xlu0 %v1900, 48
      %v1978 = vpop.permute.xlu0 %1977
      %1979 = vrot.lane.b32.xlu0 %v1902, 48
      %v1980 = vpop.permute.xlu0 %1979
      %1981 = vrot.lane.b32.xlu0 %v1904, 48
      %v1982 = vpop.permute.xlu0 %1981
      %1983 = vrot.lane.b32.xlu0 %v1906, 48
      %v1984 = vpop.permute.xlu0 %1983
      %1985 = vrot.lane.b32.xlu0 %v1908, 48
      %v1986 = vpop.permute.xlu0 %1985
      %1987 = vrot.lane.b32.xlu0 %v1910, 48
      %v1988 = vpop.permute.xlu0 %1987
      %1989 = vrot.lane.b32.xlu0 %v1912, 48
      %v1990 = vpop.permute.xlu0 %1989
      %1991 = vrot.lane.b32.xlu0 %v1914, 48
      %v1992 = vpop.permute.xlu0 %1991
      %1993 = vrot.lane.b32.xlu0 %v1916, 48
      %v1994 = vpop.permute.xlu0 %1993
      %1995 = vrot.lane.b32.xlu0 %v1918, 48
      %v1996 = vpop.permute.xlu0 %1995
      %1997 = vrot.lane.b32.xlu0 %v1920, 48
      %v1998 = vpop.permute.xlu0 %1997
      %1999 = vrot.lane.b32.xlu0 %v1922, 48
      %v2000 = vpop.permute.xlu0 %1999
      %2001 = vrot.lane.b32.xlu0 %v1924, 48
      %v2002 = vpop.permute.xlu0 %2001
      %2003 = vrot.lane.b32.xlu0 %v1926, 48
      %v2004 = vpop.permute.xlu0 %2003
      %2005 = vrot.lane.b32.xlu0 %v1928, 48
      %v2006 = vpop.permute.xlu0 %2005
      %2007 = vrot.lane.b32.xlu0 0, 48
      %v2008 = vpop.permute.xlu0 %2007
      %v2010 = vsel %vm1043, 0, %v1946
      %v2012 = vsel %vm1043, %v1898, %v1948
      %v2014 = vsel %vm1043, %v1900, %v1950
      %v2016 = vsel %vm1043, %v1902, %v1952
      %v2018 = vsel %vm1043, %v1904, %v1954
      %v2020 = vsel %vm1043, %v1906, %v1956
      %v2022 = vsel %vm1043, %v1908, %v1958
      %v2024 = vsel %vm1043, %v1910, %v1960
      %v2026 = vsel %vm1043, %v1912, %v1962
      %v2028 = vsel %vm1043, %v1914, %v1964
      %v2030 = vsel %vm1043, %v1916, %v1966
      %v2032 = vsel %vm1043, %v1918, %v1968
      %v2034 = vsel %vm1043, %v1920, %v1970
      %v2036 = vsel %vm1043, %v1922, %v1972
      %v2038 = vsel %vm1043, %v1924, %v1974
      %v2040 = vsel %vm1043, %v1926, %v1976
      %vm2041 = vcmask 392192
      %v2043 = vsel %vm2041, %v2010, %v1978
      %v2045 = vsel %vm2041, %v2012, %v1980
      %v2047 = vsel %vm2041, %v2014, %v1982
      %v2049 = vsel %vm2041, %v2016, %v1984
      %v2051 = vsel %vm2041, %v2018, %v1986
      %v2053 = vsel %vm2041, %v2020, %v1988
      %v2055 = vsel %vm2041, %v2022, %v1990
      %v2057 = vsel %vm2041, %v2024, %v1992
      %v2059 = vsel %vm2041, %v2026, %v1994
      %v2061 = vsel %vm2041, %v2028, %v1996
      %v2063 = vsel %vm2041, %v2030, %v1998
      %v2065 = vsel %vm2041, %v2032, %v2000
      %v2067 = vsel %vm2041, %v2034, %v2002
      %v2069 = vsel %vm2041, %v2036, %v2004
      %v2071 = vsel %vm2041, %v2038, %v2006
      %v2073 = vsel %vm2041, %v2040, %v2008
      %v2075 = vlaneseq
      %v2076 = vshrl.u32 %v2075, 7
      %v2077 = vsub.s32 0, %v2076
      %v2078 = vrot.slane %v227, %v2077
      %v2089 = vunpack.c.l.b16 %v1343
      %v2090 = vunpack.c.l.b16 %v1344
      %v2091 = vunpack.c.l.b16 %v1345
      %v2092 = vunpack.c.l.b16 %v1346
      %v2093 = vunpack.c.l.b16 %v1347
      %v2094 = vunpack.c.l.b16 %v1348
      %v2095 = vunpack.c.l.b16 %v1349
      %v2096 = vunpack.c.l.b16 %v1350
      %v2097 = vunpack.c.l.b16 %v1351
      %v2098 = vpack.c.b16 %v2090, %v2089
      %v2099 = vpack.c.b16 %v2092, %v2091
      %v2100 = vpack.c.b16 %v2094, %v2093
      %v2101 = vpack.c.b16 %v2096, %v2095
      %v2102 = vpack.c.b16 %v2097, %v2097
      %vm2107 = vcmask 588800
      %v2108 = vsel %vm2107, %v2043, 0
      %v2110 = vsel %vm2107, %v2045, 0
      %v2112 = vsel %vm2107, %v2047, 0
      %v2114 = vsel %vm2107, %v2049, 0
      %v2116 = vsel %vm2107, %v2051, 0
      %v2118 = vsel %vm2107, %v2053, 0
      %v2120 = vsel %vm2107, %v2055, 0
      %v2122 = vsel %vm2107, %v2057, 0
      %v2124 = vsel %vm2107, %v2059, 0
      %v2126 = vsel %vm2107, %v2061, 0
      %v2128 = vsel %vm2107, %v2063, 0
      %v2130 = vsel %vm2107, %v2065, 0
      %v2132 = vsel %vm2107, %v2067, 0
      %v2134 = vsel %vm2107, %v2069, 0
      %v2136 = vsel %vm2107, %v2071, 0
      %v2138 = vsel %vm2107, %v2073, 0
      %vm2140 = vcmask 1043456
      %v2142 = vsel %vm2140, %v2102, 0
      %2144 = vmatprep.subr.bf16.mxu0 0
      %2145 = vmatpush1.bf16.msra.mxu0 %v2098
      %2146 = vmatprep.subr.bf16.mxu0 0
      %2147 = vmatpush1.bf16.msra.mxu0 %v2099
      %2148 = vmatprep.subr.bf16.mxu0 0
      %2149 = vmatpush1.bf16.msra.mxu0 %v2100
      %2150 = vmatprep.subr.bf16.mxu0 0
      %2151 = vmatpush1.bf16.msra.mxu0 %v2101
      %2152 = vmatprep.subr.bf16.mxu0 0
      %2153 = vmatpush1.bf16.msra.mxu0 %v2142
      %2154 = vmatprep.subr.bf16.mxu0 0
      %2155 = vmatpush1.bf16.msra.mxu0 0
      %2156 = vmatprep.subr.bf16.mxu0 0
      %2157 = vmatpush1.bf16.msra.mxu0 0
      %2158 = vmatprep.subr.bf16.mxu0 0
      %2159 = vmatpush1.bf16.msra.mxu0 0
      %2160 = vmatprep.subr.bf16.mxu0 0
      %2161 = vmatpush1.bf16.msra.mxu0 0
      %2162 = vmatprep.subr.bf16.mxu0 0
      %2163 = vmatpush1.bf16.msra.mxu0 0
      %2164 = vmatprep.subr.bf16.mxu0 0
      %2165 = vmatpush1.bf16.msra.mxu0 0
      %2166 = vmatprep.subr.bf16.mxu0 0
      %2167 = vmatpush1.bf16.msra.mxu0 0
      %2168 = vmatprep.subr.bf16.mxu0 0
      %2169 = vmatpush1.bf16.msra.mxu0 0
      %2170 = vmatprep.subr.bf16.mxu0 0
      %2171 = vmatpush1.bf16.msra.mxu0 0
      %2172 = vmatprep.subr.bf16.mxu0 0
      %2173 = vmatpush1.bf16.msra.mxu0 0
      %2174 = vmatprep.subr.bf16.mxu0 0
      %2175 = vmatpush1.bf16.msra.mxu0 0
      %2176 = vmatprep.mubr.bf16.mxu0 0
      %2177 = vmatmul.mubr.bf16.gmra.mrb[0].mxu0 %v2108
      %v2178 = vpop.f32.mrb[0].mxu0
      %v2179 = vadd.f32 %v2078, %v2178
      %v2180 = vpop.f32.mrb[0].mxu0
      %v2181 = vpop.f32.mrb[0].mxu0
      %v2182 = vadd.f32 %v2078, %v2181
      %v2183 = vpop.f32.mrb[0].mxu0
      %2184 = vmatprep.mubr.bf16.mxu0 0
      %2185 = vmatmul.mubr.bf16.gmra.mrb[0].mxu0 %v2110
      %v2186 = vpop.f32.mrb[0].mxu0
      %v2187 = vadd.f32 %v2078, %v2186
      %v2188 = vpop.f32.mrb[0].mxu0
      %v2189 = vpop.f32.mrb[0].mxu0
      %v2190 = vadd.f32 %v2078, %v2189
      %v2191 = vpop.f32.mrb[0].mxu0
      %2192 = vmatprep.mubr.bf16.mxu0 0
      %2193 = vmatmul.mubr.bf16.gmra.mrb[0].mxu0 %v2112
      %v2194 = vpop.f32.mrb[0].mxu0
      %v2195 = vadd.f32 %v2078, %v2194
      %v2196 = vpop.f32.mrb[0].mxu0
      %v2197 = vpop.f32.mrb[0].mxu0
      %v2198 = vadd.f32 %v2078, %v2197
      %v2199 = vpop.f32.mrb[0].mxu0
      %2200 = vmatprep.mubr.bf16.mxu0 0
      %2201 = vmatmul.mubr.bf16.gmra.mrb[0].mxu0 %v2114
      %v2202 = vpop.f32.mrb[0].mxu0
      %v2203 = vadd.f32 %v2078, %v2202
      %v2204 = vpop.f32.mrb[0].mxu0
      %v2205 = vpop.f32.mrb[0].mxu0
      %v2206 = vadd.f32 %v2078, %v2205
      %v2207 = vpop.f32.mrb[0].mxu0
      %2208 = vmatprep.mubr.bf16.mxu0 0
      %2209 = vmatmul.mubr.bf16.gmra.mrb[0].mxu0 %v2116
      %v2210 = vpop.f32.mrb[0].mxu0
      %v2211 = vadd.f32 %v2078, %v2210
      %v2212 = vpop.f32.mrb[0].mxu0
      %v2213 = vpop.f32.mrb[0].mxu0
      %v2214 = vadd.f32 %v2078, %v2213
      %v2215 = vpop.f32.mrb[0].mxu0
      %2216 = vmatprep.mubr.bf16.mxu0 0
      %2217 = vmatmul.mubr.bf16.gmra.mrb[0].mxu0 %v2118
      %v2218 = vpop.f32.mrb[0].mxu0
      %v2219 = vadd.f32 %v2078, %v2218
      %v2220 = vpop.f32.mrb[0].mxu0
      %v2221 = vpop.f32.mrb[0].mxu0
      %v2222 = vadd.f32 %v2078, %v2221
      %v2223 = vpop.f32.mrb[0].mxu0
      %2224 = vmatprep.mubr.bf16.mxu0 0
      %2225 = vmatmul.mubr.bf16.gmra.mrb[0].mxu0 %v2120
      %v2226 = vpop.f32.mrb[0].mxu0
      %v2227 = vadd.f32 %v2078, %v2226
      %v2228 = vpop.f32.mrb[0].mxu0
      %v2229 = vpop.f32.mrb[0].mxu0
      %v2230 = vadd.f32 %v2078, %v2229
      %v2231 = vpop.f32.mrb[0].mxu0
      %2232 = vmatprep.mubr.bf16.mxu0 0
      %2233 = vmatmul.mubr.bf16.gmra.mrb[0].mxu0 %v2122
      %v2234 = vpop.f32.mrb[0].mxu0
      %v2235 = vadd.f32 %v2078, %v2234
      %v2236 = vpop.f32.mrb[0].mxu0
      %v2237 = vpop.f32.mrb[0].mxu0
      %v2238 = vadd.f32 %v2078, %v2237
      %v2239 = vpop.f32.mrb[0].mxu0
      %2240 = vmatprep.mubr.bf16.mxu0 0
      %2241 = vmatmul.mubr.bf16.gmra.mrb[0].mxu0 %v2124
      %v2242 = vpop.f32.mrb[0].mxu0
      %v2243 = vadd.f32 %v2078, %v2242
      %v2244 = vpop.f32.mrb[0].mxu0
      %v2245 = vpop.f32.mrb[0].mxu0
      %v2246 = vadd.f32 %v2078, %v2245
      %v2247 = vpop.f32.mrb[0].mxu0
      %2248 = vmatprep.mubr.bf16.mxu0 0
      %2249 = vmatmul.mubr.bf16.gmra.mrb[0].mxu0 %v2126
      %v2250 = vpop.f32.mrb[0].mxu0
      %v2251 = vadd.f32 %v2078, %v2250
      %v2252 = vpop.f32.mrb[0].mxu0
      %v2253 = vpop.f32.mrb[0].mxu0
      %v2254 = vadd.f32 %v2078, %v2253
      %v2255 = vpop.f32.mrb[0].mxu0
      %2256 = vmatprep.mubr.bf16.mxu0 0
      %2257 = vmatmul.mubr.bf16.gmra.mrb[0].mxu0 %v2128
      %v2258 = vpop.f32.mrb[0].mxu0
      %v2259 = vadd.f32 %v2078, %v2258
      %v2260 = vpop.f32.mrb[0].mxu0
      %v2261 = vpop.f32.mrb[0].mxu0
      %v2262 = vadd.f32 %v2078, %v2261
      %v2263 = vpop.f32.mrb[0].mxu0
      %2264 = vmatprep.mubr.bf16.mxu0 0
      %2265 = vmatmul.mubr.bf16.gmra.mrb[0].mxu0 %v2130
      %v2266 = vpop.f32.mrb[0].mxu0
      %v2267 = vadd.f32 %v2078, %v2266
      %v2268 = vpop.f32.mrb[0].mxu0
      %v2269 = vpop.f32.mrb[0].mxu0
      %v2270 = vadd.f32 %v2078, %v2269
      %v2271 = vpop.f32.mrb[0].mxu0
      %2272 = vmatprep.mubr.bf16.mxu0 0
      %2273 = vmatmul.mubr.bf16.gmra.mrb[0].mxu0 %v2132
      %v2274 = vpop.f32.mrb[0].mxu0
      %v2275 = vadd.f32 %v2078, %v2274
      %v2276 = vpop.f32.mrb[0].mxu0
      %v2277 = vpop.f32.mrb[0].mxu0
      %v2278 = vadd.f32 %v2078, %v2277
      %v2279 = vpop.f32.mrb[0].mxu0
      %2280 = vmatprep.mubr.bf16.mxu0 0
      %2281 = vmatmul.mubr.bf16.gmra.mrb[0].mxu0 %v2134
      %v2282 = vpop.f32.mrb[0].mxu0
      %v2283 = vadd.f32 %v2078, %v2282
      %v2284 = vpop.f32.mrb[0].mxu0
      %v2285 = vpop.f32.mrb[0].mxu0
      %v2286 = vadd.f32 %v2078, %v2285
      %v2287 = vpop.f32.mrb[0].mxu0
      %2288 = vmatprep.mubr.bf16.mxu0 0
      %2289 = vmatmul.mubr.bf16.gmra.mrb[0].mxu0 %v2136
      %v2290 = vpop.f32.mrb[0].mxu0
      %v2291 = vadd.f32 %v2078, %v2290
      %v2292 = vpop.f32.mrb[0].mxu0
      %v2293 = vpop.f32.mrb[0].mxu0
      %v2294 = vadd.f32 %v2078, %v2293
      %v2295 = vpop.f32.mrb[0].mxu0
      %2296 = vmatprep.mubr.bf16.mxu0 0
      %2297 = vmatmul.mubr.bf16.gmra.mrb[0].mxu0 %v2138
      %v2298 = vpop.f32.mrb[0].mxu0
      %v2299 = vadd.f32 %v2078, %v2298
      %v2300 = vpop.f32.mrb[0].mxu0
      %v2301 = vpop.f32.mrb[0].mxu0
      %v2302 = vadd.f32 %v2078, %v2301
      %v2303 = vpop.f32.mrb[0].mxu0
      %2304 = vdwg.mxu0
      %v2305 = vmax.f32 %v2179, 0.0
      %v2306 = vmax.f32 %v2182, 0.0
      %v2307 = vmax.f32 %v2187, 0.0
      %v2308 = vmax.f32 %v2190, 0.0
      %v2309 = vmax.f32 %v2195, 0.0
      %v2310 = vmax.f32 %v2198, 0.0
      %v2311 = vmax.f32 %v2203, 0.0
      %v2312 = vmax.f32 %v2206, 0.0
      %v2313 = vmax.f32 %v2211, 0.0
      %v2314 = vmax.f32 %v2214, 0.0
      %v2315 = vmax.f32 %v2219, 0.0
      %v2316 = vmax.f32 %v2222, 0.0
      %v2317 = vmax.f32 %v2227, 0.0
      %v2318 = vmax.f32 %v2230, 0.0
      %v2319 = vmax.f32 %v2235, 0.0
      %v2320 = vmax.f32 %v2238, 0.0
      %v2321 = vmax.f32 %v2243, 0.0
      %v2322 = vmax.f32 %v2246, 0.0
      %v2323 = vmax.f32 %v2251, 0.0
      %v2324 = vmax.f32 %v2254, 0.0
      %v2325 = vmax.f32 %v2259, 0.0
      %v2326 = vmax.f32 %v2262, 0.0
      %v2327 = vmax.f32 %v2267, 0.0
      %v2328 = vmax.f32 %v2270, 0.0
      %v2329 = vmax.f32 %v2275, 0.0
      %v2330 = vmax.f32 %v2278, 0.0
      %v2331 = vmax.f32 %v2283, 0.0
      %v2332 = vmax.f32 %v2286, 0.0
      %v2333 = vmax.f32 %v2291, 0.0
      %v2334 = vmax.f32 %v2294, 0.0
      %v2335 = vmax.f32 %v2299, 0.0
      %v2336 = vmax.f32 %v2302, 0.0
      %2337 = vst.msk [vmem:[%s224] sm:$0xff] %vm895, %v2305
      %2338 = vst.msk [vmem:[%s224 + $0x8] sm:$0xff] %vm895, %v2306
      %2339 = vst.msk [vmem:[%s224 + $0x10] sm:$0xff] %vm895, %v2307
      %2340 = vst.msk [vmem:[%s224 + $0x18] sm:$0xff] %vm895, %v2308
      %2341 = vst.msk [vmem:[%s224 + $0x20] sm:$0xff] %vm895, %v2309
      %2342 = vst.msk [vmem:[%s224 + $0x28] sm:$0xff] %vm895, %v2310
      %2343 = vst.msk [vmem:[%s224 + $0x30] sm:$0xff] %vm895, %v2311
      %2344 = vst.msk [vmem:[%s224 + $0x38] sm:$0xff] %vm895, %v2312
      %2345 = vst.msk [vmem:[%s224 + $0x40] sm:$0xff] %vm895, %v2313
      %2346 = vst.msk [vmem:[%s224 + $0x48] sm:$0xff] %vm895, %v2314
      %2347 = vst.msk [vmem:[%s224 + $0x50] sm:$0xff] %vm895, %v2315
      %2348 = vst.msk [vmem:[%s224 + $0x58] sm:$0xff] %vm895, %v2316
      %2349 = vst.msk [vmem:[%s224 + $0x60] sm:$0xff] %vm895, %v2317
      %2350 = vst.msk [vmem:[%s224 + $0x68] sm:$0xff] %vm895, %v2318
      %2351 = vst.msk [vmem:[%s224 + $0x70] sm:$0xff] %vm895, %v2319
      %2352 = vst.msk [vmem:[%s224 + $0x78] sm:$0xff] %vm895, %v2320
      %2353 = vst.msk [vmem:[%s224 + $0x80] sm:$0xff] %vm895, %v2321
      %2354 = vst.msk [vmem:[%s224 + $0x88] sm:$0xff] %vm895, %v2322
      %2355 = vst.msk [vmem:[%s224 + $0x90] sm:$0xff] %vm895, %v2323
      %2356 = vst.msk [vmem:[%s224 + $0x98] sm:$0xff] %vm895, %v2324
      %2357 = vst.msk [vmem:[%s224 + $0xa0] sm:$0xff] %vm895, %v2325
      %2358 = vst.msk [vmem:[%s224 + $0xa8] sm:$0xff] %vm895, %v2326
      %2359 = vst.msk [vmem:[%s224 + $0xb0] sm:$0xff] %vm895, %v2327
      %2360 = vst.msk [vmem:[%s224 + $0xb8] sm:$0xff] %vm895, %v2328
      %2361 = vst.msk [vmem:[%s224 + $0xc0] sm:$0xff] %vm895, %v2329
      %2362 = vst.msk [vmem:[%s224 + $0xc8] sm:$0xff] %vm895, %v2330
      %2363 = vst.msk [vmem:[%s224 + $0xd0] sm:$0xff] %vm895, %v2331
      %2364 = vst.msk [vmem:[%s224 + $0xd8] sm:$0xff] %vm895, %v2332
      %2365 = vst.msk [vmem:[%s224 + $0xe0] sm:$0xff] %vm895, %v2333
      %2366 = vst.msk [vmem:[%s224 + $0xe8] sm:$0xff] %vm895, %v2334
      %2367 = vst.msk [vmem:[%s224 + $0xf0] sm:$0xff] %vm895, %v2335
      %2368 = vst.msk [vmem:[%s224 + $0xf8] sm:$0xff] %vm895, %v2336
      %p2369 = scmp.lt.s32.totalorder %s16, 1
      %s2370 = scalar_select %p2369, %s16, 1
      %s2371 = smul.addr %s2370, 32
      %s2372 = smul.addr %s2371, 8
      %s2373 = scalar_lea.vmem %s5, %s2372
      // Predicated region
      $region41: #{double_conv_forward.1} parent=39 // pred_check
        %p2374 = pneg %p144
      $region42: #{double_conv_forward.1} parent=39 // pred_check_branch
        %2376 = sbr.rel (%p2374) target = $region44
      $region43: #{double_conv_forward.1} parent=39 // pred_region
        _
      $region44: #{double_conv_forward.1} parent=39 // pred_fallthru
        _
    $region40: #{double_conv_forward.1} parent=5 // pred_fallthru
      _
    %p2377 = scmp.le.s32.totalorder 2, %s11
    // Predicated region
    $region45: #{double_conv_forward.1} parent=5 // pred_check
      %p2378 = pneg %p2377
    $region46: #{double_conv_forward.1} parent=5 // pred_check_branch
      %2380 = sbr.rel (%p2378) target = $region48
    $region47: #{double_conv_forward.1} parent=5 // pred_region
      %s2381 = ssub.s32 %s11, 2
      // Predicated region
      $region49: #{double_conv_forward.1} parent=47 // pred_check
        %p2382 = pneg %p150
      $region50: #{double_conv_forward.1} parent=47 // pred_check_branch
        %2384 = sbr.rel (%p2382) target = $region52
      $region51: #{double_conv_forward.1} parent=47 // pred_region
        %p2385 = scmp.lt.s32.totalorder %s17, 1
        %s2386 = scalar_select %p2385, %s17, 1
        %s2387 = smul.addr %s2386, 32
        %s2388 = smul.addr %s2387, 8
        %s2389 = scalar_lea.vmem %s5, %s2388
      $region52: #{double_conv_forward.1} parent=47 // pred_fallthru
        _
    $region48: #{double_conv_forward.1} parent=5 // pred_fallthru
      _
  $region6: #{double_conv_forward.1} parent=0 // loop_footer
    %s15 = sadd.s32 1, %s11
  $region7: #{double_conv_forward.1} parent=0 // loop_footer_branch
    %10 = sbr.rel target = $region3
  $region8: #{double_conv_forward.1} parent=0 // loop_exit
    _

</llo_original>
